<compile_context>
chip_gen: v7x
topology: tpu7x:2x2x1
jax: 0.10.0
libtpu: 0.0.40
codegen_flags: <defaults>
</compile_context>

<pallas_src>
import functools
import math

import jax
import jax.numpy as jnp
from jax.experimental import pallas as pl
from jax.experimental.pallas import tpu as pltpu


def _lstm_step(gates_in, h_prev, c_prev, w_hh, hidden):
    """One LSTM cell update. gates_in already contains x@W_ih + b."""
    gates = gates_in + jnp.dot(h_prev, w_hh, preferred_element_type=jnp.float32)
    i_g = jax.nn.sigmoid(gates[:, 0 * hidden:1 * hidden])
    f_g = jax.nn.sigmoid(gates[:, 1 * hidden:2 * hidden])
    g_g = jnp.tanh(gates[:, 2 * hidden:3 * hidden])
    o_g = jax.nn.sigmoid(gates[:, 3 * hidden:4 * hidden])
    c_new = f_g * c_prev + i_g * g_g
    h_new = o_g * jnp.tanh(c_new)
    return h_new, c_new


def _lstmae_kernel(x_ref, enc_wih_ref, enc_whh_ref, enc_b_ref,
                   enc_wc_ref, enc_bc_ref,
                   dec_wih_ref, dec_whh_ref, dec_b_ref,
                   dec_wout_ref, dec_bout_ref,
                   out_ref, *, seq_len, batch):
    # x_ref: (S*B, E) flattened seq-major; out_ref: (S*B, E)
    He = enc_whh_ref.shape[0]
    Hd = dec_whh_ref.shape[0]

    # ---------------- Encoder ----------------
    # Batched input projection for ALL timesteps as one lane-dense matmul,
    # bias broadcast applied once (outside the recurrent loop).
    enc_gates_x = (jnp.dot(x_ref[...], enc_wih_ref[...],
                           preferred_element_type=jnp.float32)
                   + enc_b_ref[...])                       # (S*B, 4*He)
    enc_whh = enc_whh_ref[...]                             # resident in vregs

    h = jnp.zeros((batch, He), jnp.float32)
    c = jnp.zeros((batch, He), jnp.float32)
    # Static, short time loop — fully unrolled inside the kernel (no per-step
    # grid/pipeline overhead).
    for t in range(seq_len):
        gates_t = enc_gates_x[t * batch:(t + 1) * batch, :]
        h, c = _lstm_step(gates_t, h, c, enc_whh, He)

    code = (jnp.dot(h, enc_wc_ref[...], preferred_element_type=jnp.float32)
            + enc_bc_ref[...])                             # (B, C)

    # ---------------- Decoder ----------------
    # The decoder input is the same `code` at every step: hoist its projection
    # (and the bias broadcast) out of the time loop.
    dec_gates_code = (jnp.dot(code, dec_wih_ref[...],
                              preferred_element_type=jnp.float32)
                      + dec_b_ref[...])                    # (B, 4*Hd)
    dec_whh = dec_whh_ref[...]

    hd = jnp.zeros((batch, Hd), jnp.float32)
    cd = jnp.zeros((batch, Hd), jnp.float32)
    h_steps = []
    for t in range(seq_len):
        hd, cd = _lstm_step(dec_gates_code, hd, cd, dec_whh, Hd)
        h_steps.append(hd)

    # Single batched output projection + single full-output store
    # (instead of S tiny lane-sparse per-step stores).
    h_stack = jnp.concatenate(h_steps, axis=0)             # (S*B, Hd)
    out_ref[...] = (jnp.dot(h_stack, dec_wout_ref[...],
                            preferred_element_type=jnp.float32)
                    + dec_bout_ref[...]).astype(out_ref.dtype)


def lstmae_forward(params, x):
    """x: (seq_len, batch, em_len) -> reconstruction (seq_len, batch, em_len)."""
    S, B, E = x.shape
    x_flat = x.reshape(S * B, E)  # seq-major flatten (free XLA reshape in HBM)

    kernel = functools.partial(_lstmae_kernel, seq_len=S, batch=B)
    vmem = pl.BlockSpec(memory_space=pltpu.MemorySpace.VMEM)

    out_flat = pl.pallas_call(
        kernel,
        out_shape=jax.ShapeDtypeStruct((S * B, E), jnp.float32),
        in_specs=[vmem] * 11,
        out_specs=vmem,
    )(x_flat,
      params["enc_w_ih"], params["enc_w_hh"], params["enc_b"],
      params["enc_w_code"], params["enc_b_code"],
      params["dec_w_ih"], params["dec_w_hh"], params["dec_b"],
      params["dec_w_out"], params["dec_b_out"])
    return out_flat.reshape(S, B, E)


# ----------------------------------------------------------------------------
# Deterministic parameter init (matches nn.LSTM / nn.Linear uniform ranges).
# NOTE: LSTM weights are stored pre-transposed as (in_features, 4*hidden) with
# gate order i, f, g, o; loading real PyTorch weights ((4H, in)) requires a
# transpose and gate-order check.
# ----------------------------------------------------------------------------
def init_lstmae_params(key, em_len, code_size, encoder_size, decoder_size):
    def uniform(k, shape, scale):
        return jax.random.uniform(k, shape, jnp.float32, -scale, scale)

    ks = jax.random.split(key, 14)
    enc_s = 1.0 / math.sqrt(encoder_size)
    dec_s = 1.0 / math.sqrt(decoder_size)
    params = {
        # encoder LSTM
        "enc_w_ih": uniform(ks[0], (em_len, 4 * encoder_size), enc_s),
        "enc_w_hh": uniform(ks[1], (encoder_size, 4 * encoder_size), enc_s),
        # fused bias = b_ih + b_hh (sum of two uniforms, like nn.LSTM)
        "enc_b": (uniform(ks[2], (1, 4 * encoder_size), enc_s)
                  + uniform(ks[3], (1, 4 * encoder_size), enc_s)),
        # encoder output projection -> code
        "enc_w_code": uniform(ks[4], (encoder_size, code_size), enc_s),
        "enc_b_code": uniform(ks[5], (1, code_size), enc_s),
        # decoder LSTM
        "dec_w_ih": uniform(ks[6], (code_size, 4 * decoder_size), dec_s),
        "dec_w_hh": uniform(ks[7], (decoder_size, 4 * decoder_size), dec_s),
        "dec_b": (uniform(ks[8], (1, 4 * decoder_size), dec_s)
                  + uniform(ks[9], (1, 4 * decoder_size), dec_s)),
        # decoder output projection -> em_len
        "dec_w_out": uniform(ks[10], (decoder_size, em_len), dec_s),
        "dec_b_out": uniform(ks[11], (1, em_len), dec_s),
    }
    return params


if __name__ == "__main__":
    # TODO(synk): Encoder/Decoder submodule definitions were not supplied in the
    # spec; this implements a standard seq-first LSTM autoencoder with n_dir=1
    # and no inter-layer dropout (single LSTM layer => dropout is a no-op).
    seq_len, batch, em_len = 8, 8, 8
    code_size, encoder_size, decoder_size = 16, 32, 32

    key = jax.random.PRNGKey(0)
    pkey, xkey = jax.random.split(key)
    params = init_lstmae_params(pkey, em_len, code_size, encoder_size,
                                decoder_size)
    x = jax.random.normal(xkey, (seq_len, batch, em_len), jnp.float32)

    out = lstmae_forward(params, x)
    out = jax.block_until_ready(out)
    assert out.shape == (seq_len, batch, em_len), out.shape
    assert jnp.all(jnp.isfinite(out))
    print("KERNEL_OK")
</pallas_src>

<mosaic_0001>
module attributes {stable_mosaic.version = 11 : i64} {
  func.func @_lstmae_kernel(%arg0: memref<64x8xf32, #tpu.memory_space<vmem>>, %arg1: memref<8x128xf32, #tpu.memory_space<vmem>>, %arg2: memref<32x128xf32, #tpu.memory_space<vmem>>, %arg3: memref<1x128xf32, #tpu.memory_space<vmem>>, %arg4: memref<32x16xf32, #tpu.memory_space<vmem>>, %arg5: memref<1x16xf32, #tpu.memory_space<vmem>>, %arg6: memref<16x128xf32, #tpu.memory_space<vmem>>, %arg7: memref<32x128xf32, #tpu.memory_space<vmem>>, %arg8: memref<1x128xf32, #tpu.memory_space<vmem>>, %arg9: memref<32x8xf32, #tpu.memory_space<vmem>>, %arg10: memref<1x8xf32, #tpu.memory_space<vmem>>, %arg11: memref<64x8xf32, #tpu.memory_space<vmem>>) attributes {dimension_semantics = [], scalar_prefetch = 0 : i64, scratch_operands = 0 : i64, tpu.core_type = #tpu.core_type<tc>} {
    %c0 = arith.constant 0 : index
    %c0_0 = arith.constant 0 : index
    %0 = vector.load %arg0[%c0, %c0_0] : memref<64x8xf32, #tpu.memory_space<vmem>>, vector<64x8xf32>
    %c0_1 = arith.constant 0 : index
    %c0_2 = arith.constant 0 : index
    %1 = vector.load %arg1[%c0_1, %c0_2] : memref<8x128xf32, #tpu.memory_space<vmem>>, vector<8x128xf32>
    %cst = arith.constant dense<0.000000e+00> : vector<64x128xf32>
    %2 = tpu.matmul %0, %1, %cst {dimension_numbers = #tpu.dot_dimension_numbers<[1], [0], [0], [1], [0, 0, 1, 1], [], []>} : vector<64x8xf32>, vector<8x128xf32>, vector<64x128xf32> -> vector<64x128xf32>
    %c0_3 = arith.constant 0 : index
    %c0_4 = arith.constant 0 : index
    %3 = vector.load %arg3[%c0_3, %c0_4] : memref<1x128xf32, #tpu.memory_space<vmem>>, vector<1x128xf32>
    %4 = vector.broadcast %3 : vector<1x128xf32> to vector<64x128xf32>
    %5 = arith.addf %2, %4 : vector<64x128xf32>
    %c0_5 = arith.constant 0 : index
    %c0_6 = arith.constant 0 : index
    %6 = vector.load %arg2[%c0_5, %c0_6] : memref<32x128xf32, #tpu.memory_space<vmem>>, vector<32x128xf32>
    %cst_7 = arith.constant 0.000000e+00 : f32
    %7 = vector.broadcast %cst_7 : f32 to vector<8x32xf32>
    %cst_8 = arith.constant 0.000000e+00 : f32
    %8 = vector.broadcast %cst_8 : f32 to vector<8x32xf32>
    %9 = vector.extract_strided_slice %5 {offsets = [0, 0], sizes = [8, 128], strides = [1, 1]} : vector<64x128xf32> to vector<8x128xf32>
    %cst_9 = arith.constant dense<0.000000e+00> : vector<8x128xf32>
    %10 = tpu.matmul %7, %6, %cst_9 {dimension_numbers = #tpu.dot_dimension_numbers<[1], [0], [0], [1], [0, 0, 1, 1], [], []>} : vector<8x32xf32>, vector<32x128xf32>, vector<8x128xf32> -> vector<8x128xf32>
    %11 = arith.addf %9, %10 : vector<8x128xf32>
    %12 = vector.extract_strided_slice %11 {offsets = [0, 0], sizes = [8, 32], strides = [1, 1]} : vector<8x128xf32> to vector<8x32xf32>
    %13 = arith.negf %12 : vector<8x32xf32>
    %14 = math.exp %13 : vector<8x32xf32>
    %cst_10 = arith.constant 1.000000e+00 : f32
    %15 = vector.broadcast %cst_10 : f32 to vector<8x32xf32>
    %16 = arith.addf %15, %14 : vector<8x32xf32>
    %17 = arith.divf %15, %16 : vector<8x32xf32>
    %18 = vector.extract_strided_slice %11 {offsets = [0, 32], sizes = [8, 32], strides = [1, 1]} : vector<8x128xf32> to vector<8x32xf32>
    %19 = arith.negf %18 : vector<8x32xf32>
    %20 = math.exp %19 : vector<8x32xf32>
    %cst_11 = arith.constant 1.000000e+00 : f32
    %21 = vector.broadcast %cst_11 : f32 to vector<8x32xf32>
    %22 = arith.addf %21, %20 : vector<8x32xf32>
    %23 = arith.divf %21, %22 : vector<8x32xf32>
    %24 = vector.extract_strided_slice %11 {offsets = [0, 64], sizes = [8, 32], strides = [1, 1]} : vector<8x128xf32> to vector<8x32xf32>
    %25 = math.tanh %24 : vector<8x32xf32>
    %26 = vector.extract_strided_slice %11 {offsets = [0, 96], sizes = [8, 32], strides = [1, 1]} : vector<8x128xf32> to vector<8x32xf32>
    %27 = arith.negf %26 : vector<8x32xf32>
    %28 = math.exp %27 : vector<8x32xf32>
    %cst_12 = arith.constant 1.000000e+00 : f32
    %29 = vector.broadcast %cst_12 : f32 to vector<8x32xf32>
    %30 = arith.addf %29, %28 : vector<8x32xf32>
    %31 = arith.divf %29, %30 : vector<8x32xf32>
    %32 = arith.mulf %23, %8 : vector<8x32xf32>
    %33 = arith.mulf %17, %25 : vector<8x32xf32>
    %34 = arith.addf %32, %33 : vector<8x32xf32>
    %35 = math.tanh %34 : vector<8x32xf32>
    %36 = arith.mulf %31, %35 : vector<8x32xf32>
    %37 = vector.extract_strided_slice %5 {offsets = [8, 0], sizes = [8, 128], strides = [1, 1]} : vector<64x128xf32> to vector<8x128xf32>
    %cst_13 = arith.constant dense<0.000000e+00> : vector<8x128xf32>
    %38 = tpu.matmul %36, %6, %cst_13 {dimension_numbers = #tpu.dot_dimension_numbers<[1], [0], [0], [1], [0, 0, 1, 1], [], []>} : vector<8x32xf32>, vector<32x128xf32>, vector<8x128xf32> -> vector<8x128xf32>
    %39 = arith.addf %37, %38 : vector<8x128xf32>
    %40 = vector.extract_strided_slice %39 {offsets = [0, 0], sizes = [8, 32], strides = [1, 1]} : vector<8x128xf32> to vector<8x32xf32>
    %41 = arith.negf %40 : vector<8x32xf32>
    %42 = math.exp %41 : vector<8x32xf32>
    %cst_14 = arith.constant 1.000000e+00 : f32
    %43 = vector.broadcast %cst_14 : f32 to vector<8x32xf32>
    %44 = arith.addf %43, %42 : vector<8x32xf32>
    %45 = arith.divf %43, %44 : vector<8x32xf32>
    %46 = vector.extract_strided_slice %39 {offsets = [0, 32], sizes = [8, 32], strides = [1, 1]} : vector<8x128xf32> to vector<8x32xf32>
    %47 = arith.negf %46 : vector<8x32xf32>
    %48 = math.exp %47 : vector<8x32xf32>
    %cst_15 = arith.constant 1.000000e+00 : f32
    %49 = vector.broadcast %cst_15 : f32 to vector<8x32xf32>
    %50 = arith.addf %49, %48 : vector<8x32xf32>
    %51 = arith.divf %49, %50 : vector<8x32xf32>
    %52 = vector.extract_strided_slice %39 {offsets = [0, 64], sizes = [8, 32], strides = [1, 1]} : vector<8x128xf32> to vector<8x32xf32>
    %53 = math.tanh %52 : vector<8x32xf32>
    %54 = vector.extract_strided_slice %39 {offsets = [0, 96], sizes = [8, 32], strides = [1, 1]} : vector<8x128xf32> to vector<8x32xf32>
    %55 = arith.negf %54 : vector<8x32xf32>
    %56 = math.exp %55 : vector<8x32xf32>
    %cst_16 = arith.constant 1.000000e+00 : f32
    %57 = vector.broadcast %cst_16 : f32 to vector<8x32xf32>
    %58 = arith.addf %57, %56 : vector<8x32xf32>
    %59 = arith.divf %57, %58 : vector<8x32xf32>
    %60 = arith.mulf %51, %34 : vector<8x32xf32>
    %61 = arith.mulf %45, %53 : vector<8x32xf32>
    %62 = arith.addf %60, %61 : vector<8x32xf32>
    %63 = math.tanh %62 : vector<8x32xf32>
    %64 = arith.mulf %59, %63 : vector<8x32xf32>
    %65 = vector.extract_strided_slice %5 {offsets = [16, 0], sizes = [8, 128], strides = [1, 1]} : vector<64x128xf32> to vector<8x128xf32>
    %cst_17 = arith.constant dense<0.000000e+00> : vector<8x128xf32>
    %66 = tpu.matmul %64, %6, %cst_17 {dimension_numbers = #tpu.dot_dimension_numbers<[1], [0], [0], [1], [0, 0, 1, 1], [], []>} : vector<8x32xf32>, vector<32x128xf32>, vector<8x128xf32> -> vector<8x128xf32>
    %67 = arith.addf %65, %66 : vector<8x128xf32>
    %68 = vector.extract_strided_slice %67 {offsets = [0, 0], sizes = [8, 32], strides = [1, 1]} : vector<8x128xf32> to vector<8x32xf32>
    %69 = arith.negf %68 : vector<8x32xf32>
    %70 = math.exp %69 : vector<8x32xf32>
    %cst_18 = arith.constant 1.000000e+00 : f32
    %71 = vector.broadcast %cst_18 : f32 to vector<8x32xf32>
    %72 = arith.addf %71, %70 : vector<8x32xf32>
    %73 = arith.divf %71, %72 : vector<8x32xf32>
    %74 = vector.extract_strided_slice %67 {offsets = [0, 32], sizes = [8, 32], strides = [1, 1]} : vector<8x128xf32> to vector<8x32xf32>
    %75 = arith.negf %74 : vector<8x32xf32>
    %76 = math.exp %75 : vector<8x32xf32>
    %cst_19 = arith.constant 1.000000e+00 : f32
    %77 = vector.broadcast %cst_19 : f32 to vector<8x32xf32>
    %78 = arith.addf %77, %76 : vector<8x32xf32>
    %79 = arith.divf %77, %78 : vector<8x32xf32>
    %80 = vector.extract_strided_slice %67 {offsets = [0, 64], sizes = [8, 32], strides = [1, 1]} : vector<8x128xf32> to vector<8x32xf32>
    %81 = math.tanh %80 : vector<8x32xf32>
    %82 = vector.extract_strided_slice %67 {offsets = [0, 96], sizes = [8, 32], strides = [1, 1]} : vector<8x128xf32> to vector<8x32xf32>
    %83 = arith.negf %82 : vector<8x32xf32>
    %84 = math.exp %83 : vector<8x32xf32>
    %cst_20 = arith.constant 1.000000e+00 : f32
    %85 = vector.broadcast %cst_20 : f32 to vector<8x32xf32>
    %86 = arith.addf %85, %84 : vector<8x32xf32>
    %87 = arith.divf %85, %86 : vector<8x32xf32>
    %88 = arith.mulf %79, %62 : vector<8x32xf32>
    %89 = arith.mulf %73, %81 : vector<8x32xf32>
    %90 = arith.addf %88, %89 : vector<8x32xf32>
    %91 = math.tanh %90 : vector<8x32xf32>
    %92 = arith.mulf %87, %91 : vector<8x32xf32>
    %93 = vector.extract_strided_slice %5 {offsets = [24, 0], sizes = [8, 128], strides = [1, 1]} : vector<64x128xf32> to vector<8x128xf32>
    %cst_21 = arith.constant dense<0.000000e+00> : vector<8x128xf32>
    %94 = tpu.matmul %92, %6, %cst_21 {dimension_numbers = #tpu.dot_dimension_numbers<[1], [0], [0], [1], [0, 0, 1, 1], [], []>} : vector<8x32xf32>, vector<32x128xf32>, vector<8x128xf32> -> vector<8x128xf32>
    %95 = arith.addf %93, %94 : vector<8x128xf32>
    %96 = vector.extract_strided_slice %95 {offsets = [0, 0], sizes = [8, 32], strides = [1, 1]} : vector<8x128xf32> to vector<8x32xf32>
    %97 = arith.negf %96 : vector<8x32xf32>
    %98 = math.exp %97 : vector<8x32xf32>
    %cst_22 = arith.constant 1.000000e+00 : f32
    %99 = vector.broadcast %cst_22 : f32 to vector<8x32xf32>
    %100 = arith.addf %99, %98 : vector<8x32xf32>
    %101 = arith.divf %99, %100 : vector<8x32xf32>
    %102 = vector.extract_strided_slice %95 {offsets = [0, 32], sizes = [8, 32], strides = [1, 1]} : vector<8x128xf32> to vector<8x32xf32>
    %103 = arith.negf %102 : vector<8x32xf32>
    %104 = math.exp %103 : vector<8x32xf32>
    %cst_23 = arith.constant 1.000000e+00 : f32
    %105 = vector.broadcast %cst_23 : f32 to vector<8x32xf32>
    %106 = arith.addf %105, %104 : vector<8x32xf32>
    %107 = arith.divf %105, %106 : vector<8x32xf32>
    %108 = vector.extract_strided_slice %95 {offsets = [0, 64], sizes = [8, 32], strides = [1, 1]} : vector<8x128xf32> to vector<8x32xf32>
    %109 = math.tanh %108 : vector<8x32xf32>
    %110 = vector.extract_strided_slice %95 {offsets = [0, 96], sizes = [8, 32], strides = [1, 1]} : vector<8x128xf32> to vector<8x32xf32>
    %111 = arith.negf %110 : vector<8x32xf32>
    %112 = math.exp %111 : vector<8x32xf32>
    %cst_24 = arith.constant 1.000000e+00 : f32
    %113 = vector.broadcast %cst_24 : f32 to vector<8x32xf32>
    %114 = arith.addf %113, %112 : vector<8x32xf32>
    %115 = arith.divf %113, %114 : vector<8x32xf32>
    %116 = arith.mulf %107, %90 : vector<8x32xf32>
    %117 = arith.mulf %101, %109 : vector<8x32xf32>
    %118 = arith.addf %116, %117 : vector<8x32xf32>
    %119 = math.tanh %118 : vector<8x32xf32>
    %120 = arith.mulf %115, %119 : vector<8x32xf32>
    %121 = vector.extract_strided_slice %5 {offsets = [32, 0], sizes = [8, 128], strides = [1, 1]} : vector<64x128xf32> to vector<8x128xf32>
    %cst_25 = arith.constant dense<0.000000e+00> : vector<8x128xf32>
    %122 = tpu.matmul %120, %6, %cst_25 {dimension_numbers = #tpu.dot_dimension_numbers<[1], [0], [0], [1], [0, 0, 1, 1], [], []>} : vector<8x32xf32>, vector<32x128xf32>, vector<8x128xf32> -> vector<8x128xf32>
    %123 = arith.addf %121, %122 : vector<8x128xf32>
    %124 = vector.extract_strided_slice %123 {offsets = [0, 0], sizes = [8, 32], strides = [1, 1]} : vector<8x128xf32> to vector<8x32xf32>
    %125 = arith.negf %124 : vector<8x32xf32>
    %126 = math.exp %125 : vector<8x32xf32>
    %cst_26 = arith.constant 1.000000e+00 : f32
    %127 = vector.broadcast %cst_26 : f32 to vector<8x32xf32>
    %128 = arith.addf %127, %126 : vector<8x32xf32>
    %129 = arith.divf %127, %128 : vector<8x32xf32>
    %130 = vector.extract_strided_slice %123 {offsets = [0, 32], sizes = [8, 32], strides = [1, 1]} : vector<8x128xf32> to vector<8x32xf32>
    %131 = arith.negf %130 : vector<8x32xf32>
    %132 = math.exp %131 : vector<8x32xf32>
    %cst_27 = arith.constant 1.000000e+00 : f32
    %133 = vector.broadcast %cst_27 : f32 to vector<8x32xf32>
    %134 = arith.addf %133, %132 : vector<8x32xf32>
    %135 = arith.divf %133, %134 : vector<8x32xf32>
    %136 = vector.extract_strided_slice %123 {offsets = [0, 64], sizes = [8, 32], strides = [1, 1]} : vector<8x128xf32> to vector<8x32xf32>
    %137 = math.tanh %136 : vector<8x32xf32>
    %138 = vector.extract_strided_slice %123 {offsets = [0, 96], sizes = [8, 32], strides = [1, 1]} : vector<8x128xf32> to vector<8x32xf32>
    %139 = arith.negf %138 : vector<8x32xf32>
    %140 = math.exp %139 : vector<8x32xf32>
    %cst_28 = arith.constant 1.000000e+00 : f32
    %141 = vector.broadcast %cst_28 : f32 to vector<8x32xf32>
    %142 = arith.addf %141, %140 : vector<8x32xf32>
    %143 = arith.divf %141, %142 : vector<8x32xf32>
    %144 = arith.mulf %135, %118 : vector<8x32xf32>
    %145 = arith.mulf %129, %137 : vector<8x32xf32>
    %146 = arith.addf %144, %145 : vector<8x32xf32>
    %147 = math.tanh %146 : vector<8x32xf32>
    %148 = arith.mulf %143, %147 : vector<8x32xf32>
    %149 = vector.extract_strided_slice %5 {offsets = [40, 0], sizes = [8, 128], strides = [1, 1]} : vector<64x128xf32> to vector<8x128xf32>
    %cst_29 = arith.constant dense<0.000000e+00> : vector<8x128xf32>
    %150 = tpu.matmul %148, %6, %cst_29 {dimension_numbers = #tpu.dot_dimension_numbers<[1], [0], [0], [1], [0, 0, 1, 1], [], []>} : vector<8x32xf32>, vector<32x128xf32>, vector<8x128xf32> -> vector<8x128xf32>
    %151 = arith.addf %149, %150 : vector<8x128xf32>
    %152 = vector.extract_strided_slice %151 {offsets = [0, 0], sizes = [8, 32], strides = [1, 1]} : vector<8x128xf32> to vector<8x32xf32>
    %153 = arith.negf %152 : vector<8x32xf32>
    %154 = math.exp %153 : vector<8x32xf32>
    %cst_30 = arith.constant 1.000000e+00 : f32
    %155 = vector.broadcast %cst_30 : f32 to vector<8x32xf32>
    %156 = arith.addf %155, %154 : vector<8x32xf32>
    %157 = arith.divf %155, %156 : vector<8x32xf32>
    %158 = vector.extract_strided_slice %151 {offsets = [0, 32], sizes = [8, 32], strides = [1, 1]} : vector<8x128xf32> to vector<8x32xf32>
    %159 = arith.negf %158 : vector<8x32xf32>
    %160 = math.exp %159 : vector<8x32xf32>
    %cst_31 = arith.constant 1.000000e+00 : f32
    %161 = vector.broadcast %cst_31 : f32 to vector<8x32xf32>
    %162 = arith.addf %161, %160 : vector<8x32xf32>
    %163 = arith.divf %161, %162 : vector<8x32xf32>
    %164 = vector.extract_strided_slice %151 {offsets = [0, 64], sizes = [8, 32], strides = [1, 1]} : vector<8x128xf32> to vector<8x32xf32>
    %165 = math.tanh %164 : vector<8x32xf32>
    %166 = vector.extract_strided_slice %151 {offsets = [0, 96], sizes = [8, 32], strides = [1, 1]} : vector<8x128xf32> to vector<8x32xf32>
    %167 = arith.negf %166 : vector<8x32xf32>
    %168 = math.exp %167 : vector<8x32xf32>
    %cst_32 = arith.constant 1.000000e+00 : f32
    %169 = vector.broadcast %cst_32 : f32 to vector<8x32xf32>
    %170 = arith.addf %169, %168 : vector<8x32xf32>
    %171 = arith.divf %169, %170 : vector<8x32xf32>
    %172 = arith.mulf %163, %146 : vector<8x32xf32>
    %173 = arith.mulf %157, %165 : vector<8x32xf32>
    %174 = arith.addf %172, %173 : vector<8x32xf32>
    %175 = math.tanh %174 : vector<8x32xf32>
    %176 = arith.mulf %171, %175 : vector<8x32xf32>
    %177 = vector.extract_strided_slice %5 {offsets = [48, 0], sizes = [8, 128], strides = [1, 1]} : vector<64x128xf32> to vector<8x128xf32>
    %cst_33 = arith.constant dense<0.000000e+00> : vector<8x128xf32>
    %178 = tpu.matmul %176, %6, %cst_33 {dimension_numbers = #tpu.dot_dimension_numbers<[1], [0], [0], [1], [0, 0, 1, 1], [], []>} : vector<8x32xf32>, vector<32x128xf32>, vector<8x128xf32> -> vector<8x128xf32>
    %179 = arith.addf %177, %178 : vector<8x128xf32>
    %180 = vector.extract_strided_slice %179 {offsets = [0, 0], sizes = [8, 32], strides = [1, 1]} : vector<8x128xf32> to vector<8x32xf32>
    %181 = arith.negf %180 : vector<8x32xf32>
    %182 = math.exp %181 : vector<8x32xf32>
    %cst_34 = arith.constant 1.000000e+00 : f32
    %183 = vector.broadcast %cst_34 : f32 to vector<8x32xf32>
    %184 = arith.addf %183, %182 : vector<8x32xf32>
    %185 = arith.divf %183, %184 : vector<8x32xf32>
    %186 = vector.extract_strided_slice %179 {offsets = [0, 32], sizes = [8, 32], strides = [1, 1]} : vector<8x128xf32> to vector<8x32xf32>
    %187 = arith.negf %186 : vector<8x32xf32>
    %188 = math.exp %187 : vector<8x32xf32>
    %cst_35 = arith.constant 1.000000e+00 : f32
    %189 = vector.broadcast %cst_35 : f32 to vector<8x32xf32>
    %190 = arith.addf %189, %188 : vector<8x32xf32>
    %191 = arith.divf %189, %190 : vector<8x32xf32>
    %192 = vector.extract_strided_slice %179 {offsets = [0, 64], sizes = [8, 32], strides = [1, 1]} : vector<8x128xf32> to vector<8x32xf32>
    %193 = math.tanh %192 : vector<8x32xf32>
    %194 = vector.extract_strided_slice %179 {offsets = [0, 96], sizes = [8, 32], strides = [1, 1]} : vector<8x128xf32> to vector<8x32xf32>
    %195 = arith.negf %194 : vector<8x32xf32>
    %196 = math.exp %195 : vector<8x32xf32>
    %cst_36 = arith.constant 1.000000e+00 : f32
    %197 = vector.broadcast %cst_36 : f32 to vector<8x32xf32>
    %198 = arith.addf %197, %196 : vector<8x32xf32>
    %199 = arith.divf %197, %198 : vector<8x32xf32>
    %200 = arith.mulf %191, %174 : vector<8x32xf32>
    %201 = arith.mulf %185, %193 : vector<8x32xf32>
    %202 = arith.addf %200, %201 : vector<8x32xf32>
    %203 = math.tanh %202 : vector<8x32xf32>
    %204 = arith.mulf %199, %203 : vector<8x32xf32>
    %205 = vector.extract_strided_slice %5 {offsets = [56, 0], sizes = [8, 128], strides = [1, 1]} : vector<64x128xf32> to vector<8x128xf32>
    %cst_37 = arith.constant dense<0.000000e+00> : vector<8x128xf32>
    %206 = tpu.matmul %204, %6, %cst_37 {dimension_numbers = #tpu.dot_dimension_numbers<[1], [0], [0], [1], [0, 0, 1, 1], [], []>} : vector<8x32xf32>, vector<32x128xf32>, vector<8x128xf32> -> vector<8x128xf32>
    %207 = arith.addf %205, %206 : vector<8x128xf32>
    %208 = vector.extract_strided_slice %207 {offsets = [0, 0], sizes = [8, 32], strides = [1, 1]} : vector<8x128xf32> to vector<8x32xf32>
    %209 = arith.negf %208 : vector<8x32xf32>
    %210 = math.exp %209 : vector<8x32xf32>
    %cst_38 = arith.constant 1.000000e+00 : f32
    %211 = vector.broadcast %cst_38 : f32 to vector<8x32xf32>
    %212 = arith.addf %211, %210 : vector<8x32xf32>
    %213 = arith.divf %211, %212 : vector<8x32xf32>
    %214 = vector.extract_strided_slice %207 {offsets = [0, 32], sizes = [8, 32], strides = [1, 1]} : vector<8x128xf32> to vector<8x32xf32>
    %215 = arith.negf %214 : vector<8x32xf32>
    %216 = math.exp %215 : vector<8x32xf32>
    %cst_39 = arith.constant 1.000000e+00 : f32
    %217 = vector.broadcast %cst_39 : f32 to vector<8x32xf32>
    %218 = arith.addf %217, %216 : vector<8x32xf32>
    %219 = arith.divf %217, %218 : vector<8x32xf32>
    %220 = vector.extract_strided_slice %207 {offsets = [0, 64], sizes = [8, 32], strides = [1, 1]} : vector<8x128xf32> to vector<8x32xf32>
    %221 = math.tanh %220 : vector<8x32xf32>
    %222 = vector.extract_strided_slice %207 {offsets = [0, 96], sizes = [8, 32], strides = [1, 1]} : vector<8x128xf32> to vector<8x32xf32>
    %223 = arith.negf %222 : vector<8x32xf32>
    %224 = math.exp %223 : vector<8x32xf32>
    %cst_40 = arith.constant 1.000000e+00 : f32
    %225 = vector.broadcast %cst_40 : f32 to vector<8x32xf32>
    %226 = arith.addf %225, %224 : vector<8x32xf32>
    %227 = arith.divf %225, %226 : vector<8x32xf32>
    %228 = arith.mulf %219, %202 : vector<8x32xf32>
    %229 = arith.mulf %213, %221 : vector<8x32xf32>
    %230 = arith.addf %228, %229 : vector<8x32xf32>
    %231 = math.tanh %230 : vector<8x32xf32>
    %232 = arith.mulf %227, %231 : vector<8x32xf32>
    %c0_41 = arith.constant 0 : index
    %c0_42 = arith.constant 0 : index
    %233 = vector.load %arg4[%c0_41, %c0_42] : memref<32x16xf32, #tpu.memory_space<vmem>>, vector<32x16xf32>
    %cst_43 = arith.constant dense<0.000000e+00> : vector<8x16xf32>
    %234 = tpu.matmul %232, %233, %cst_43 {dimension_numbers = #tpu.dot_dimension_numbers<[1], [0], [0], [1], [0, 0, 1, 1], [], []>} : vector<8x32xf32>, vector<32x16xf32>, vector<8x16xf32> -> vector<8x16xf32>
    %c0_44 = arith.constant 0 : index
    %c0_45 = arith.constant 0 : index
    %235 = vector.load %arg5[%c0_44, %c0_45] : memref<1x16xf32, #tpu.memory_space<vmem>>, vector<1x16xf32>
    %236 = vector.broadcast %235 : vector<1x16xf32> to vector<8x16xf32>
    %237 = arith.addf %234, %236 : vector<8x16xf32>
    %c0_46 = arith.constant 0 : index
    %c0_47 = arith.constant 0 : index
    %238 = vector.load %arg6[%c0_46, %c0_47] : memref<16x128xf32, #tpu.memory_space<vmem>>, vector<16x128xf32>
    %cst_48 = arith.constant dense<0.000000e+00> : vector<8x128xf32>
    %239 = tpu.matmul %237, %238, %cst_48 {dimension_numbers = #tpu.dot_dimension_numbers<[1], [0], [0], [1], [0, 0, 1, 1], [], []>} : vector<8x16xf32>, vector<16x128xf32>, vector<8x128xf32> -> vector<8x128xf32>
    %c0_49 = arith.constant 0 : index
    %c0_50 = arith.constant 0 : index
    %240 = vector.load %arg8[%c0_49, %c0_50] : memref<1x128xf32, #tpu.memory_space<vmem>>, vector<1x128xf32>
    %241 = vector.broadcast %240 : vector<1x128xf32> to vector<8x128xf32>
    %242 = arith.addf %239, %241 : vector<8x128xf32>
    %c0_51 = arith.constant 0 : index
    %c0_52 = arith.constant 0 : index
    %243 = vector.load %arg7[%c0_51, %c0_52] : memref<32x128xf32, #tpu.memory_space<vmem>>, vector<32x128xf32>
    %cst_53 = arith.constant 0.000000e+00 : f32
    %244 = vector.broadcast %cst_53 : f32 to vector<8x32xf32>
    %cst_54 = arith.constant 0.000000e+00 : f32
    %245 = vector.broadcast %cst_54 : f32 to vector<8x32xf32>
    %cst_55 = arith.constant dense<0.000000e+00> : vector<8x128xf32>
    %246 = tpu.matmul %244, %243, %cst_55 {dimension_numbers = #tpu.dot_dimension_numbers<[1], [0], [0], [1], [0, 0, 1, 1], [], []>} : vector<8x32xf32>, vector<32x128xf32>, vector<8x128xf32> -> vector<8x128xf32>
    %247 = arith.addf %242, %246 : vector<8x128xf32>
    %248 = vector.extract_strided_slice %247 {offsets = [0, 0], sizes = [8, 32], strides = [1, 1]} : vector<8x128xf32> to vector<8x32xf32>
    %249 = arith.negf %248 : vector<8x32xf32>
    %250 = math.exp %249 : vector<8x32xf32>
    %cst_56 = arith.constant 1.000000e+00 : f32
    %251 = vector.broadcast %cst_56 : f32 to vector<8x32xf32>
    %252 = arith.addf %251, %250 : vector<8x32xf32>
    %253 = arith.divf %251, %252 : vector<8x32xf32>
    %254 = vector.extract_strided_slice %247 {offsets = [0, 32], sizes = [8, 32], strides = [1, 1]} : vector<8x128xf32> to vector<8x32xf32>
    %255 = arith.negf %254 : vector<8x32xf32>
    %256 = math.exp %255 : vector<8x32xf32>
    %cst_57 = arith.constant 1.000000e+00 : f32
    %257 = vector.broadcast %cst_57 : f32 to vector<8x32xf32>
    %258 = arith.addf %257, %256 : vector<8x32xf32>
    %259 = arith.divf %257, %258 : vector<8x32xf32>
    %260 = vector.extract_strided_slice %247 {offsets = [0, 64], sizes = [8, 32], strides = [1, 1]} : vector<8x128xf32> to vector<8x32xf32>
    %261 = math.tanh %260 : vector<8x32xf32>
    %262 = vector.extract_strided_slice %247 {offsets = [0, 96], sizes = [8, 32], strides = [1, 1]} : vector<8x128xf32> to vector<8x32xf32>
    %263 = arith.negf %262 : vector<8x32xf32>
    %264 = math.exp %263 : vector<8x32xf32>
    %cst_58 = arith.constant 1.000000e+00 : f32
    %265 = vector.broadcast %cst_58 : f32 to vector<8x32xf32>
    %266 = arith.addf %265, %264 : vector<8x32xf32>
    %267 = arith.divf %265, %266 : vector<8x32xf32>
    %268 = arith.mulf %259, %245 : vector<8x32xf32>
    %269 = arith.mulf %253, %261 : vector<8x32xf32>
    %270 = arith.addf %268, %269 : vector<8x32xf32>
    %271 = math.tanh %270 : vector<8x32xf32>
    %272 = arith.mulf %267, %271 : vector<8x32xf32>
    %cst_59 = arith.constant dense<0.000000e+00> : vector<8x128xf32>
    %273 = tpu.matmul %272, %243, %cst_59 {dimension_numbers = #tpu.dot_dimension_numbers<[1], [0], [0], [1], [0, 0, 1, 1], [], []>} : vector<8x32xf32>, vector<32x128xf32>, vector<8x128xf32> -> vector<8x128xf32>
    %274 = arith.addf %242, %273 : vector<8x128xf32>
    %275 = vector.extract_strided_slice %274 {offsets = [0, 0], sizes = [8, 32], strides = [1, 1]} : vector<8x128xf32> to vector<8x32xf32>
    %276 = arith.negf %275 : vector<8x32xf32>
    %277 = math.exp %276 : vector<8x32xf32>
    %cst_60 = arith.constant 1.000000e+00 : f32
    %278 = vector.broadcast %cst_60 : f32 to vector<8x32xf32>
    %279 = arith.addf %278, %277 : vector<8x32xf32>
    %280 = arith.divf %278, %279 : vector<8x32xf32>
    %281 = vector.extract_strided_slice %274 {offsets = [0, 32], sizes = [8, 32], strides = [1, 1]} : vector<8x128xf32> to vector<8x32xf32>
    %282 = arith.negf %281 : vector<8x32xf32>
    %283 = math.exp %282 : vector<8x32xf32>
    %cst_61 = arith.constant 1.000000e+00 : f32
    %284 = vector.broadcast %cst_61 : f32 to vector<8x32xf32>
    %285 = arith.addf %284, %283 : vector<8x32xf32>
    %286 = arith.divf %284, %285 : vector<8x32xf32>
    %287 = vector.extract_strided_slice %274 {offsets = [0, 64], sizes = [8, 32], strides = [1, 1]} : vector<8x128xf32> to vector<8x32xf32>
    %288 = math.tanh %287 : vector<8x32xf32>
    %289 = vector.extract_strided_slice %274 {offsets = [0, 96], sizes = [8, 32], strides = [1, 1]} : vector<8x128xf32> to vector<8x32xf32>
    %290 = arith.negf %289 : vector<8x32xf32>
    %291 = math.exp %290 : vector<8x32xf32>
    %cst_62 = arith.constant 1.000000e+00 : f32
    %292 = vector.broadcast %cst_62 : f32 to vector<8x32xf32>
    %293 = arith.addf %292, %291 : vector<8x32xf32>
    %294 = arith.divf %292, %293 : vector<8x32xf32>
    %295 = arith.mulf %286, %270 : vector<8x32xf32>
    %296 = arith.mulf %280, %288 : vector<8x32xf32>
    %297 = arith.addf %295, %296 : vector<8x32xf32>
    %298 = math.tanh %297 : vector<8x32xf32>
    %299 = arith.mulf %294, %298 : vector<8x32xf32>
    %cst_63 = arith.constant dense<0.000000e+00> : vector<8x128xf32>
    %300 = tpu.matmul %299, %243, %cst_63 {dimension_numbers = #tpu.dot_dimension_numbers<[1], [0], [0], [1], [0, 0, 1, 1], [], []>} : vector<8x32xf32>, vector<32x128xf32>, vector<8x128xf32> -> vector<8x128xf32>
    %301 = arith.addf %242, %300 : vector<8x128xf32>
    %302 = vector.extract_strided_slice %301 {offsets = [0, 0], sizes = [8, 32], strides = [1, 1]} : vector<8x128xf32> to vector<8x32xf32>
    %303 = arith.negf %302 : vector<8x32xf32>
    %304 = math.exp %303 : vector<8x32xf32>
    %cst_64 = arith.constant 1.000000e+00 : f32
    %305 = vector.broadcast %cst_64 : f32 to vector<8x32xf32>
    %306 = arith.addf %305, %304 : vector<8x32xf32>
    %307 = arith.divf %305, %306 : vector<8x32xf32>
    %308 = vector.extract_strided_slice %301 {offsets = [0, 32], sizes = [8, 32], strides = [1, 1]} : vector<8x128xf32> to vector<8x32xf32>
    %309 = arith.negf %308 : vector<8x32xf32>
    %310 = math.exp %309 : vector<8x32xf32>
    %cst_65 = arith.constant 1.000000e+00 : f32
    %311 = vector.broadcast %cst_65 : f32 to vector<8x32xf32>
    %312 = arith.addf %311, %310 : vector<8x32xf32>
    %313 = arith.divf %311, %312 : vector<8x32xf32>
    %314 = vector.extract_strided_slice %301 {offsets = [0, 64], sizes = [8, 32], strides = [1, 1]} : vector<8x128xf32> to vector<8x32xf32>
    %315 = math.tanh %314 : vector<8x32xf32>
    %316 = vector.extract_strided_slice %301 {offsets = [0, 96], sizes = [8, 32], strides = [1, 1]} : vector<8x128xf32> to vector<8x32xf32>
    %317 = arith.negf %316 : vector<8x32xf32>
    %318 = math.exp %317 : vector<8x32xf32>
    %cst_66 = arith.constant 1.000000e+00 : f32
    %319 = vector.broadcast %cst_66 : f32 to vector<8x32xf32>
    %320 = arith.addf %319, %318 : vector<8x32xf32>
    %321 = arith.divf %319, %320 : vector<8x32xf32>
    %322 = arith.mulf %313, %297 : vector<8x32xf32>
    %323 = arith.mulf %307, %315 : vector<8x32xf32>
    %324 = arith.addf %322, %323 : vector<8x32xf32>
    %325 = math.tanh %324 : vector<8x32xf32>
    %326 = arith.mulf %321, %325 : vector<8x32xf32>
    %cst_67 = arith.constant dense<0.000000e+00> : vector<8x128xf32>
    %327 = tpu.matmul %326, %243, %cst_67 {dimension_numbers = #tpu.dot_dimension_numbers<[1], [0], [0], [1], [0, 0, 1, 1], [], []>} : vector<8x32xf32>, vector<32x128xf32>, vector<8x128xf32> -> vector<8x128xf32>
    %328 = arith.addf %242, %327 : vector<8x128xf32>
    %329 = vector.extract_strided_slice %328 {offsets = [0, 0], sizes = [8, 32], strides = [1, 1]} : vector<8x128xf32> to vector<8x32xf32>
    %330 = arith.negf %329 : vector<8x32xf32>
    %331 = math.exp %330 : vector<8x32xf32>
    %cst_68 = arith.constant 1.000000e+00 : f32
    %332 = vector.broadcast %cst_68 : f32 to vector<8x32xf32>
    %333 = arith.addf %332, %331 : vector<8x32xf32>
    %334 = arith.divf %332, %333 : vector<8x32xf32>
    %335 = vector.extract_strided_slice %328 {offsets = [0, 32], sizes = [8, 32], strides = [1, 1]} : vector<8x128xf32> to vector<8x32xf32>
    %336 = arith.negf %335 : vector<8x32xf32>
    %337 = math.exp %336 : vector<8x32xf32>
    %cst_69 = arith.constant 1.000000e+00 : f32
    %338 = vector.broadcast %cst_69 : f32 to vector<8x32xf32>
    %339 = arith.addf %338, %337 : vector<8x32xf32>
    %340 = arith.divf %338, %339 : vector<8x32xf32>
    %341 = vector.extract_strided_slice %328 {offsets = [0, 64], sizes = [8, 32], strides = [1, 1]} : vector<8x128xf32> to vector<8x32xf32>
    %342 = math.tanh %341 : vector<8x32xf32>
    %343 = vector.extract_strided_slice %328 {offsets = [0, 96], sizes = [8, 32], strides = [1, 1]} : vector<8x128xf32> to vector<8x32xf32>
    %344 = arith.negf %343 : vector<8x32xf32>
    %345 = math.exp %344 : vector<8x32xf32>
    %cst_70 = arith.constant 1.000000e+00 : f32
    %346 = vector.broadcast %cst_70 : f32 to vector<8x32xf32>
    %347 = arith.addf %346, %345 : vector<8x32xf32>
    %348 = arith.divf %346, %347 : vector<8x32xf32>
    %349 = arith.mulf %340, %324 : vector<8x32xf32>
    %350 = arith.mulf %334, %342 : vector<8x32xf32>
    %351 = arith.addf %349, %350 : vector<8x32xf32>
    %352 = math.tanh %351 : vector<8x32xf32>
    %353 = arith.mulf %348, %352 : vector<8x32xf32>
    %cst_71 = arith.constant dense<0.000000e+00> : vector<8x128xf32>
    %354 = tpu.matmul %353, %243, %cst_71 {dimension_numbers = #tpu.dot_dimension_numbers<[1], [0], [0], [1], [0, 0, 1, 1], [], []>} : vector<8x32xf32>, vector<32x128xf32>, vector<8x128xf32> -> vector<8x128xf32>
    %355 = arith.addf %242, %354 : vector<8x128xf32>
    %356 = vector.extract_strided_slice %355 {offsets = [0, 0], sizes = [8, 32], strides = [1, 1]} : vector<8x128xf32> to vector<8x32xf32>
    %357 = arith.negf %356 : vector<8x32xf32>
    %358 = math.exp %357 : vector<8x32xf32>
    %cst_72 = arith.constant 1.000000e+00 : f32
    %359 = vector.broadcast %cst_72 : f32 to vector<8x32xf32>
    %360 = arith.addf %359, %358 : vector<8x32xf32>
    %361 = arith.divf %359, %360 : vector<8x32xf32>
    %362 = vector.extract_strided_slice %355 {offsets = [0, 32], sizes = [8, 32], strides = [1, 1]} : vector<8x128xf32> to vector<8x32xf32>
    %363 = arith.negf %362 : vector<8x32xf32>
    %364 = math.exp %363 : vector<8x32xf32>
    %cst_73 = arith.constant 1.000000e+00 : f32
    %365 = vector.broadcast %cst_73 : f32 to vector<8x32xf32>
    %366 = arith.addf %365, %364 : vector<8x32xf32>
    %367 = arith.divf %365, %366 : vector<8x32xf32>
    %368 = vector.extract_strided_slice %355 {offsets = [0, 64], sizes = [8, 32], strides = [1, 1]} : vector<8x128xf32> to vector<8x32xf32>
    %369 = math.tanh %368 : vector<8x32xf32>
    %370 = vector.extract_strided_slice %355 {offsets = [0, 96], sizes = [8, 32], strides = [1, 1]} : vector<8x128xf32> to vector<8x32xf32>
    %371 = arith.negf %370 : vector<8x32xf32>
    %372 = math.exp %371 : vector<8x32xf32>
    %cst_74 = arith.constant 1.000000e+00 : f32
    %373 = vector.broadcast %cst_74 : f32 to vector<8x32xf32>
    %374 = arith.addf %373, %372 : vector<8x32xf32>
    %375 = arith.divf %373, %374 : vector<8x32xf32>
    %376 = arith.mulf %367, %351 : vector<8x32xf32>
    %377 = arith.mulf %361, %369 : vector<8x32xf32>
    %378 = arith.addf %376, %377 : vector<8x32xf32>
    %379 = math.tanh %378 : vector<8x32xf32>
    %380 = arith.mulf %375, %379 : vector<8x32xf32>
    %cst_75 = arith.constant dense<0.000000e+00> : vector<8x128xf32>
    %381 = tpu.matmul %380, %243, %cst_75 {dimension_numbers = #tpu.dot_dimension_numbers<[1], [0], [0], [1], [0, 0, 1, 1], [], []>} : vector<8x32xf32>, vector<32x128xf32>, vector<8x128xf32> -> vector<8x128xf32>
    %382 = arith.addf %242, %381 : vector<8x128xf32>
    %383 = vector.extract_strided_slice %382 {offsets = [0, 0], sizes = [8, 32], strides = [1, 1]} : vector<8x128xf32> to vector<8x32xf32>
    %384 = arith.negf %383 : vector<8x32xf32>
    %385 = math.exp %384 : vector<8x32xf32>
    %cst_76 = arith.constant 1.000000e+00 : f32
    %386 = vector.broadcast %cst_76 : f32 to vector<8x32xf32>
    %387 = arith.addf %386, %385 : vector<8x32xf32>
    %388 = arith.divf %386, %387 : vector<8x32xf32>
    %389 = vector.extract_strided_slice %382 {offsets = [0, 32], sizes = [8, 32], strides = [1, 1]} : vector<8x128xf32> to vector<8x32xf32>
    %390 = arith.negf %389 : vector<8x32xf32>
    %391 = math.exp %390 : vector<8x32xf32>
    %cst_77 = arith.constant 1.000000e+00 : f32
    %392 = vector.broadcast %cst_77 : f32 to vector<8x32xf32>
    %393 = arith.addf %392, %391 : vector<8x32xf32>
    %394 = arith.divf %392, %393 : vector<8x32xf32>
    %395 = vector.extract_strided_slice %382 {offsets = [0, 64], sizes = [8, 32], strides = [1, 1]} : vector<8x128xf32> to vector<8x32xf32>
    %396 = math.tanh %395 : vector<8x32xf32>
    %397 = vector.extract_strided_slice %382 {offsets = [0, 96], sizes = [8, 32], strides = [1, 1]} : vector<8x128xf32> to vector<8x32xf32>
    %398 = arith.negf %397 : vector<8x32xf32>
    %399 = math.exp %398 : vector<8x32xf32>
    %cst_78 = arith.constant 1.000000e+00 : f32
    %400 = vector.broadcast %cst_78 : f32 to vector<8x32xf32>
    %401 = arith.addf %400, %399 : vector<8x32xf32>
    %402 = arith.divf %400, %401 : vector<8x32xf32>
    %403 = arith.mulf %394, %378 : vector<8x32xf32>
    %404 = arith.mulf %388, %396 : vector<8x32xf32>
    %405 = arith.addf %403, %404 : vector<8x32xf32>
    %406 = math.tanh %405 : vector<8x32xf32>
    %407 = arith.mulf %402, %406 : vector<8x32xf32>
    %cst_79 = arith.constant dense<0.000000e+00> : vector<8x128xf32>
    %408 = tpu.matmul %407, %243, %cst_79 {dimension_numbers = #tpu.dot_dimension_numbers<[1], [0], [0], [1], [0, 0, 1, 1], [], []>} : vector<8x32xf32>, vector<32x128xf32>, vector<8x128xf32> -> vector<8x128xf32>
    %409 = arith.addf %242, %408 : vector<8x128xf32>
    %410 = vector.extract_strided_slice %409 {offsets = [0, 0], sizes = [8, 32], strides = [1, 1]} : vector<8x128xf32> to vector<8x32xf32>
    %411 = arith.negf %410 : vector<8x32xf32>
    %412 = math.exp %411 : vector<8x32xf32>
    %cst_80 = arith.constant 1.000000e+00 : f32
    %413 = vector.broadcast %cst_80 : f32 to vector<8x32xf32>
    %414 = arith.addf %413, %412 : vector<8x32xf32>
    %415 = arith.divf %413, %414 : vector<8x32xf32>
    %416 = vector.extract_strided_slice %409 {offsets = [0, 32], sizes = [8, 32], strides = [1, 1]} : vector<8x128xf32> to vector<8x32xf32>
    %417 = arith.negf %416 : vector<8x32xf32>
    %418 = math.exp %417 : vector<8x32xf32>
    %cst_81 = arith.constant 1.000000e+00 : f32
    %419 = vector.broadcast %cst_81 : f32 to vector<8x32xf32>
    %420 = arith.addf %419, %418 : vector<8x32xf32>
    %421 = arith.divf %419, %420 : vector<8x32xf32>
    %422 = vector.extract_strided_slice %409 {offsets = [0, 64], sizes = [8, 32], strides = [1, 1]} : vector<8x128xf32> to vector<8x32xf32>
    %423 = math.tanh %422 : vector<8x32xf32>
    %424 = vector.extract_strided_slice %409 {offsets = [0, 96], sizes = [8, 32], strides = [1, 1]} : vector<8x128xf32> to vector<8x32xf32>
    %425 = arith.negf %424 : vector<8x32xf32>
    %426 = math.exp %425 : vector<8x32xf32>
    %cst_82 = arith.constant 1.000000e+00 : f32
    %427 = vector.broadcast %cst_82 : f32 to vector<8x32xf32>
    %428 = arith.addf %427, %426 : vector<8x32xf32>
    %429 = arith.divf %427, %428 : vector<8x32xf32>
    %430 = arith.mulf %421, %405 : vector<8x32xf32>
    %431 = arith.mulf %415, %423 : vector<8x32xf32>
    %432 = arith.addf %430, %431 : vector<8x32xf32>
    %433 = math.tanh %432 : vector<8x32xf32>
    %434 = arith.mulf %429, %433 : vector<8x32xf32>
    %cst_83 = arith.constant dense<0.000000e+00> : vector<8x128xf32>
    %435 = tpu.matmul %434, %243, %cst_83 {dimension_numbers = #tpu.dot_dimension_numbers<[1], [0], [0], [1], [0, 0, 1, 1], [], []>} : vector<8x32xf32>, vector<32x128xf32>, vector<8x128xf32> -> vector<8x128xf32>
    %436 = arith.addf %242, %435 : vector<8x128xf32>
    %437 = vector.extract_strided_slice %436 {offsets = [0, 0], sizes = [8, 32], strides = [1, 1]} : vector<8x128xf32> to vector<8x32xf32>
    %438 = arith.negf %437 : vector<8x32xf32>
    %439 = math.exp %438 : vector<8x32xf32>
    %cst_84 = arith.constant 1.000000e+00 : f32
    %440 = vector.broadcast %cst_84 : f32 to vector<8x32xf32>
    %441 = arith.addf %440, %439 : vector<8x32xf32>
    %442 = arith.divf %440, %441 : vector<8x32xf32>
    %443 = vector.extract_strided_slice %436 {offsets = [0, 32], sizes = [8, 32], strides = [1, 1]} : vector<8x128xf32> to vector<8x32xf32>
    %444 = arith.negf %443 : vector<8x32xf32>
    %445 = math.exp %444 : vector<8x32xf32>
    %cst_85 = arith.constant 1.000000e+00 : f32
    %446 = vector.broadcast %cst_85 : f32 to vector<8x32xf32>
    %447 = arith.addf %446, %445 : vector<8x32xf32>
    %448 = arith.divf %446, %447 : vector<8x32xf32>
    %449 = vector.extract_strided_slice %436 {offsets = [0, 64], sizes = [8, 32], strides = [1, 1]} : vector<8x128xf32> to vector<8x32xf32>
    %450 = math.tanh %449 : vector<8x32xf32>
    %451 = vector.extract_strided_slice %436 {offsets = [0, 96], sizes = [8, 32], strides = [1, 1]} : vector<8x128xf32> to vector<8x32xf32>
    %452 = arith.negf %451 : vector<8x32xf32>
    %453 = math.exp %452 : vector<8x32xf32>
    %cst_86 = arith.constant 1.000000e+00 : f32
    %454 = vector.broadcast %cst_86 : f32 to vector<8x32xf32>
    %455 = arith.addf %454, %453 : vector<8x32xf32>
    %456 = arith.divf %454, %455 : vector<8x32xf32>
    %457 = arith.mulf %448, %432 : vector<8x32xf32>
    %458 = arith.mulf %442, %450 : vector<8x32xf32>
    %459 = arith.addf %457, %458 : vector<8x32xf32>
    %460 = math.tanh %459 : vector<8x32xf32>
    %461 = arith.mulf %456, %460 : vector<8x32xf32>
    %462 = tpu.concatenate %272, %299, %326, %353, %380, %407, %434, %461 in 0 : vector<8x32xf32>, vector<8x32xf32>, vector<8x32xf32>, vector<8x32xf32>, vector<8x32xf32>, vector<8x32xf32>, vector<8x32xf32>, vector<8x32xf32> -> vector<64x32xf32>
    %c0_87 = arith.constant 0 : index
    %c0_88 = arith.constant 0 : index
    %463 = vector.load %arg9[%c0_87, %c0_88] : memref<32x8xf32, #tpu.memory_space<vmem>>, vector<32x8xf32>
    %cst_89 = arith.constant dense<0.000000e+00> : vector<64x8xf32>
    %464 = tpu.matmul %462, %463, %cst_89 {dimension_numbers = #tpu.dot_dimension_numbers<[1], [0], [0], [1], [0, 0, 1, 1], [], []>} : vector<64x32xf32>, vector<32x8xf32>, vector<64x8xf32> -> vector<64x8xf32>
    %c0_90 = arith.constant 0 : index
    %c0_91 = arith.constant 0 : index
    %465 = vector.load %arg10[%c0_90, %c0_91] : memref<1x8xf32, #tpu.memory_space<vmem>>, vector<1x8xf32>
    %466 = vector.broadcast %465 : vector<1x8xf32> to vector<64x8xf32>
    %467 = arith.addf %464, %466 : vector<64x8xf32>
    %c0_92 = arith.constant 0 : index
    %c0_93 = arith.constant 0 : index
    %468 = vector.load %arg11[%c0_92, %c0_93] : memref<64x8xf32, #tpu.memory_space<vmem>>, vector<64x8xf32>
    tpu.vector_store %arg11[%c0_92, %c0_93], %467 {strides = array<i32>} : memref<64x8xf32, #tpu.memory_space<vmem>>, vector<64x8xf32>,
    return
  }
}

</mosaic_0001>

<llo_original>
// kernel: tpu_custom_call.1
$region0: #{tpu_custom_call.1}
  #allocation0 [shape = 'u32[]', space=smem, size = 0x4, offset = 0x4, fixed_abs, tag = 'smem constant byte address 0x4 - core index']
  #allocation1 [shape = 'u32[144,128]{1,0:T(1,128)}', space=vmem, size = 0x12000, scoped, tag = 'internal scratch']
  %s0 = inlined_call_operand.vmem [shape: f32[64,8], index: 0, kind: input, shape index: {}]
  %s1 = inlined_call_operand.vmem [shape: f32[8,128], index: 1, kind: input, shape index: {}]
  %s2 = inlined_call_operand.vmem [shape: f32[32,128], index: 2, kind: input, shape index: {}]
  %s3 = inlined_call_operand.vmem [shape: f32[1,128], index: 3, kind: input, shape index: {}]
  %s4 = inlined_call_operand.vmem [shape: f32[32,16], index: 4, kind: input, shape index: {}]
  %s5 = inlined_call_operand.vmem [shape: f32[1,16], index: 5, kind: input, shape index: {}]
  %s6 = inlined_call_operand.vmem [shape: f32[16,128], index: 6, kind: input, shape index: {}]
  %s7 = inlined_call_operand.vmem [shape: f32[32,128], index: 7, kind: input, shape index: {}]
  %s8 = inlined_call_operand.vmem [shape: f32[1,128], index: 8, kind: input, shape index: {}]
  %s9 = inlined_call_operand.vmem [shape: f32[32,8], index: 9, kind: input, shape index: {}]
  %s10 = inlined_call_operand.vmem [shape: f32[1,8], index: 10, kind: input, shape index: {}]
  %s11 = inlined_call_operand.vmem [shape: f32[64,8], index: 11, kind: output, shape index: {}]
  %s12 = sld [smem:[#allocation0]]
  $region54: #{tpu_custom_call.1} parent=0
    _
  %s14 = ssub.s32 1, %s12
  %s15 = scalar_select 0, %s14, %s12
  // Predicated region
  $region2: #{tpu_custom_call.1} parent=0 // pred_check
    _
  $region3: #{tpu_custom_call.1} parent=0 // pred_check_branch
    %17 = sbr.rel (0) target = $region5
  $region4: #{tpu_custom_call.1} parent=0 // pred_region
    _
  $region5: #{tpu_custom_call.1} parent=0 // pred_fallthru
    _
  // Predicated region
  $region6: #{tpu_custom_call.1} parent=0 // pred_check
    _
  $region7: #{tpu_custom_call.1} parent=0 // pred_check_branch
    %19 = sbr.rel (0) target = $region9
  $region8: #{tpu_custom_call.1} parent=0 // pred_region
    _
  $region9: #{tpu_custom_call.1} parent=0 // pred_fallthru
    _
  // Predicated region
  $region10: #{tpu_custom_call.1} parent=0 // pred_check
    _
  $region11: #{tpu_custom_call.1} parent=0 // pred_check_branch
    %21 = sbr.rel (0) target = $region13
  $region12: #{tpu_custom_call.1} parent=0 // pred_region
    _
  $region13: #{tpu_custom_call.1} parent=0 // pred_fallthru
    _
  // Predicated region
  $region14: #{tpu_custom_call.1} parent=0 // pred_check
    _
  $region15: #{tpu_custom_call.1} parent=0 // pred_check_branch
    %23 = sbr.rel (0) target = $region17
  $region16: #{tpu_custom_call.1} parent=0 // pred_region
    _
  $region17: #{tpu_custom_call.1} parent=0 // pred_fallthru
    _
  // Predicated region
  $region18: #{tpu_custom_call.1} parent=0 // pred_check
    _
  $region19: #{tpu_custom_call.1} parent=0 // pred_check_branch
    %25 = sbr.rel (0) target = $region21
  $region20: #{tpu_custom_call.1} parent=0 // pred_region
    _
  $region21: #{tpu_custom_call.1} parent=0 // pred_fallthru
    _
  // Predicated region
  $region22: #{tpu_custom_call.1} parent=0 // pred_check
    _
  $region23: #{tpu_custom_call.1} parent=0 // pred_check_branch
    %27 = sbr.rel (0) target = $region25
  $region24: #{tpu_custom_call.1} parent=0 // pred_region
    _
  $region25: #{tpu_custom_call.1} parent=0 // pred_fallthru
    _
  // Predicated region
  $region26: #{tpu_custom_call.1} parent=0 // pred_check
    _
  $region27: #{tpu_custom_call.1} parent=0 // pred_check_branch
    %29 = sbr.rel (0) target = $region29
  $region28: #{tpu_custom_call.1} parent=0 // pred_region
    _
  $region29: #{tpu_custom_call.1} parent=0 // pred_fallthru
    _
  // Predicated region
  $region30: #{tpu_custom_call.1} parent=0 // pred_check
    _
  $region31: #{tpu_custom_call.1} parent=0 // pred_check_branch
    %31 = sbr.rel (0) target = $region33
  $region32: #{tpu_custom_call.1} parent=0 // pred_region
    _
  $region33: #{tpu_custom_call.1} parent=0 // pred_fallthru
    _
  // Predicated region
  $region34: #{tpu_custom_call.1} parent=0 // pred_check
    _
  $region35: #{tpu_custom_call.1} parent=0 // pred_check_branch
    %33 = sbr.rel (0) target = $region37
  $region36: #{tpu_custom_call.1} parent=0 // pred_region
    _
  $region37: #{tpu_custom_call.1} parent=0 // pred_fallthru
    _
  // Predicated region
  $region38: #{tpu_custom_call.1} parent=0 // pred_check
    _
  $region39: #{tpu_custom_call.1} parent=0 // pred_check_branch
    %35 = sbr.rel (0) target = $region41
  $region40: #{tpu_custom_call.1} parent=0 // pred_region
    _
  $region41: #{tpu_custom_call.1} parent=0 // pred_fallthru
    _
  // Predicated region
  $region42: #{tpu_custom_call.1} parent=0 // pred_check
    _
  $region43: #{tpu_custom_call.1} parent=0 // pred_check_branch
    %37 = sbr.rel (0) target = $region45
  $region44: #{tpu_custom_call.1} parent=0 // pred_region
    _
  $region45: #{tpu_custom_call.1} parent=0 // pred_fallthru
    _
  %v38 = vld [vmem:[%s0] sm:$0xff]
  %v39 = vld [vmem:[%s0 + $0x8] sm:$0xff]
  %v40 = vld [vmem:[%s0 + $0x10] sm:$0xff]
  %v41 = vld [vmem:[%s0 + $0x18] sm:$0xff]
  %v42 = vld [vmem:[%s0 + $0x20] sm:$0xff]
  %v43 = vld [vmem:[%s0 + $0x28] sm:$0xff]
  %v44 = vld [vmem:[%s0 + $0x30] sm:$0xff]
  %v45 = vld [vmem:[%s0 + $0x38] sm:$0xff]
  %v46 = vld [vmem:[%s1] sm:$0xff]
  %v47 = vld [vmem:[%s3] sm:$0x1]
  %v49 = vlaneseq
  %v50 = vshrl.u32 %v49, 7
  %v51 = vsub.s32 0, %v50
  %v52 = vrot.slane %v47, %v51
  %vm54 = vcmask 64512
  %v56 = vsel %vm54, %v38, 0
  %v59 = vsel %vm54, %v39, 0
  %v62 = vsel %vm54, %v40, 0
  %v65 = vsel %vm54, %v41, 0
  %v68 = vsel %vm54, %v42, 0
  %v71 = vsel %vm54, %v43, 0
  %v74 = vsel %vm54, %v44, 0
  %v77 = vsel %vm54, %v45, 0
  %79 = vmatprep.subr.mxu0 0.0
  %80 = vmatpush1.msra.mxu0 %v46
  %81 = vmatprep.subr.mxu0 0.0
  %82 = vmatpush1.msra.mxu0 0.0
  %83 = vmatprep.subr.mxu0 0.0
  %84 = vmatpush1.msra.mxu0 0.0
  %85 = vmatprep.subr.mxu0 0.0
  %86 = vmatpush1.msra.mxu0 0.0
  %87 = vmatprep.subr.mxu0 0.0
  %88 = vmatpush1.msra.mxu0 0.0
  %89 = vmatprep.subr.mxu0 0.0
  %90 = vmatpush1.msra.mxu0 0.0
  %91 = vmatprep.subr.mxu0 0.0
  %92 = vmatpush1.msra.mxu0 0.0
  %93 = vmatprep.subr.mxu0 0.0
  %94 = vmatpush1.msra.mxu0 0.0
  %95 = vmatprep.subr.mxu0 0.0
  %96 = vmatpush1.msra.mxu0 0.0
  %97 = vmatprep.subr.mxu0 0.0
  %98 = vmatpush1.msra.mxu0 0.0
  %99 = vmatprep.subr.mxu0 0.0
  %100 = vmatpush1.msra.mxu0 0.0
  %101 = vmatprep.subr.mxu0 0.0
  %102 = vmatpush1.msra.mxu0 0.0
  %103 = vmatprep.subr.mxu0 0.0
  %104 = vmatpush1.msra.mxu0 0.0
  %105 = vmatprep.subr.mxu0 0.0
  %106 = vmatpush1.msra.mxu0 0.0
  %107 = vmatprep.subr.mxu0 0.0
  %108 = vmatpush1.msra.mxu0 0.0
  %109 = vmatprep.subr.mxu0 0.0
  %110 = vmatpush1.msra.mxu0 0.0
  %111 = vmatprep.subr.mxu0 0.0
  %112 = vmatpush1.msra.mxu0 0.0
  %113 = vmatprep.subr.mxu0 0.0
  %114 = vmatpush1.msra.mxu0 0.0
  %115 = vmatprep.subr.mxu0 0.0
  %116 = vmatpush1.msra.mxu0 0.0
  %117 = vmatprep.subr.mxu0 0.0
  %118 = vmatpush1.msra.mxu0 0.0
  %119 = vmatprep.subr.mxu0 0.0
  %120 = vmatpush1.msra.mxu0 0.0
  %121 = vmatprep.subr.mxu0 0.0
  %122 = vmatpush1.msra.mxu0 0.0
  %123 = vmatprep.subr.mxu0 0.0
  %124 = vmatpush1.msra.mxu0 0.0
  %125 = vmatprep.subr.mxu0 0.0
  %126 = vmatpush1.msra.mxu0 0.0
  %127 = vmatprep.subr.mxu0 0.0
  %128 = vmatpush1.msra.mxu0 0.0
  %129 = vmatprep.subr.mxu0 0.0
  %130 = vmatpush1.msra.mxu0 0.0
  %131 = vmatprep.subr.mxu0 0.0
  %132 = vmatpush1.msra.mxu0 0.0
  %133 = vmatprep.subr.mxu0 0.0
  %134 = vmatpush1.msra.mxu0 0.0
  %135 = vmatprep.subr.mxu0 0.0
  %136 = vmatpush1.msra.mxu0 0.0
  %137 = vmatprep.subr.mxu0 0.0
  %138 = vmatpush1.msra.mxu0 0.0
  %139 = vmatprep.subr.mxu0 0.0
  %140 = vmatpush1.msra.mxu0 0.0
  %141 = vmatprep.subr.mxu0 0.0
  %142 = vmatpush1.msra.mxu0 0.0
  %143 = vmatprep.mubr.f32.mxu0 0.0
  %144 = vmatmul.mubr.f32.gmra.mrb[0].mxu0 %v56
  %v145 = vpop.f32.mrb[0].mxu0
  %v146 = vadd.f32 %v52, %v145
  %v147 = vpop.f32.mrb[0].mxu0
  %148 = vmatprep.mubr.f32.mxu0 0.0
  %149 = vmatmul.mubr.f32.gmra.mrb[0].mxu0 %v59
  %v150 = vpop.f32.mrb[0].mxu0
  %v151 = vadd.f32 %v52, %v150
  %v152 = vpop.f32.mrb[0].mxu0
  %153 = vmatprep.mubr.f32.mxu0 0.0
  %154 = vmatmul.mubr.f32.gmra.mrb[0].mxu0 %v62
  %v155 = vpop.f32.mrb[0].mxu0
  %v156 = vadd.f32 %v52, %v155
  %v157 = vpop.f32.mrb[0].mxu0
  %158 = vmatprep.mubr.f32.mxu0 0.0
  %159 = vmatmul.mubr.f32.gmra.mrb[0].mxu0 %v65
  %v160 = vpop.f32.mrb[0].mxu0
  %v161 = vadd.f32 %v52, %v160
  %v162 = vpop.f32.mrb[0].mxu0
  %163 = vmatprep.mubr.f32.mxu0 0.0
  %164 = vmatmul.mubr.f32.gmra.mrb[0].mxu0 %v68
  %v165 = vpop.f32.mrb[0].mxu0
  %v166 = vadd.f32 %v52, %v165
  %v167 = vpop.f32.mrb[0].mxu0
  %168 = vmatprep.mubr.f32.mxu0 0.0
  %169 = vmatmul.mubr.f32.gmra.mrb[0].mxu0 %v71
  %v170 = vpop.f32.mrb[0].mxu0
  %v171 = vadd.f32 %v52, %v170
  %v172 = vpop.f32.mrb[0].mxu0
  %173 = vmatprep.mubr.f32.mxu0 0.0
  %174 = vmatmul.mubr.f32.gmra.mrb[0].mxu0 %v74
  %v175 = vpop.f32.mrb[0].mxu0
  %v176 = vadd.f32 %v52, %v175
  %v177 = vpop.f32.mrb[0].mxu0
  %178 = vmatprep.mubr.f32.mxu0 0.0
  %179 = vmatmul.mubr.f32.gmra.mrb[0].mxu0 %v77
  %v180 = vpop.f32.mrb[0].mxu0
  %v181 = vadd.f32 %v52, %v180
  %v182 = vpop.f32.mrb[0].mxu0
  %183 = vdwg.mxu0
  %v184 = vld [vmem:[%s2] sm:$0xff]
  %v185 = vld [vmem:[%s2 + $0x8] sm:$0xff]
  %v186 = vld [vmem:[%s2 + $0x10] sm:$0xff]
  %v187 = vld [vmem:[%s2 + $0x18] sm:$0xff]
  %vm188 = vcmask 261120
  %v190 = vsel %vm188, 0.0, 0
  %192 = vmatprep.subr.mxu0 0.0
  %193 = vmatpush1.msra.mxu0 %v184
  %194 = vmatprep.subr.mxu0 0.0
  %195 = vmatpush1.msra.mxu0 %v185
  %196 = vmatprep.subr.mxu0 0.0
  %197 = vmatpush1.msra.mxu0 %v186
  %198 = vmatprep.subr.mxu0 0.0
  %199 = vmatpush1.msra.mxu0 %v187
  %200 = vmatprep.subr.mxu0 0.0
  %201 = vmatpush1.msra.mxu0 0.0
  %202 = vmatprep.subr.mxu0 0.0
  %203 = vmatpush1.msra.mxu0 0.0
  %204 = vmatprep.subr.mxu0 0.0
  %205 = vmatpush1.msra.mxu0 0.0
  %206 = vmatprep.subr.mxu0 0.0
  %207 = vmatpush1.msra.mxu0 0.0
  %208 = vmatprep.subr.mxu0 0.0
  %209 = vmatpush1.msra.mxu0 0.0
  %210 = vmatprep.subr.mxu0 0.0
  %211 = vmatpush1.msra.mxu0 0.0
  %212 = vmatprep.subr.mxu0 0.0
  %213 = vmatpush1.msra.mxu0 0.0
  %214 = vmatprep.subr.mxu0 0.0
  %215 = vmatpush1.msra.mxu0 0.0
  %216 = vmatprep.subr.mxu0 0.0
  %217 = vmatpush1.msra.mxu0 0.0
  %218 = vmatprep.subr.mxu0 0.0
  %219 = vmatpush1.msra.mxu0 0.0
  %220 = vmatprep.subr.mxu0 0.0
  %221 = vmatpush1.msra.mxu0 0.0
  %222 = vmatprep.subr.mxu0 0.0
  %223 = vmatpush1.msra.mxu0 0.0
  %224 = vmatprep.subr.mxu0 0.0
  %225 = vmatpush1.msra.mxu0 0.0
  %226 = vmatprep.subr.mxu0 0.0
  %227 = vmatpush1.msra.mxu0 0.0
  %228 = vmatprep.subr.mxu0 0.0
  %229 = vmatpush1.msra.mxu0 0.0
  %230 = vmatprep.subr.mxu0 0.0
  %231 = vmatpush1.msra.mxu0 0.0
  %232 = vmatprep.subr.mxu0 0.0
  %233 = vmatpush1.msra.mxu0 0.0
  %234 = vmatprep.subr.mxu0 0.0
  %235 = vmatpush1.msra.mxu0 0.0
  %236 = vmatprep.subr.mxu0 0.0
  %237 = vmatpush1.msra.mxu0 0.0
  %238 = vmatprep.subr.mxu0 0.0
  %239 = vmatpush1.msra.mxu0 0.0
  %240 = vmatprep.subr.mxu0 0.0
  %241 = vmatpush1.msra.mxu0 0.0
  %242 = vmatprep.subr.mxu0 0.0
  %243 = vmatpush1.msra.mxu0 0.0
  %244 = vmatprep.subr.mxu0 0.0
  %245 = vmatpush1.msra.mxu0 0.0
  %246 = vmatprep.subr.mxu0 0.0
  %247 = vmatpush1.msra.mxu0 0.0
  %248 = vmatprep.subr.mxu0 0.0
  %249 = vmatpush1.msra.mxu0 0.0
  %250 = vmatprep.subr.mxu0 0.0
  %251 = vmatpush1.msra.mxu0 0.0
  %252 = vmatprep.subr.mxu0 0.0
  %253 = vmatpush1.msra.mxu0 0.0
  %254 = vmatprep.subr.mxu0 0.0
  %255 = vmatpush1.msra.mxu0 0.0
  %256 = vmatprep.mubr.f32.mxu0 0.0
  %257 = vmatmul.mubr.f32.gmra.mrb[0].mxu0 %v190
  %v258 = vpop.f32.mrb[0].mxu0
  %v259 = vadd.f32 0.0, %v258
  %v260 = vpop.f32.mrb[0].mxu0
  %261 = vdwg.mxu0
  %v262 = vadd.f32 %v146, %v259
  %v263 = vxor.u32 %v262, 2147483648
  %v264 = vmul.f32 %v263, 1.442695
  %v265 = vpow.pop %v264
  %v266 = vadd.f32 %v265, 1.0
  %v267 = vrcp.pop %v266
  %v268 = vmul.f32 1.0, %v267
  %v269 = vtanh.pop %v262
  %v270 = vmul.f32 %v268, 0.0
  %272 = vrot.lane.b32.xlu0 %v269, 64
  %v273 = vpop.permute.xlu0 %272
  %v275 = vmul.f32 %v268, %v273
  %277 = vrot.lane.b32.xlu0 %v275, 32
  %v278 = vpop.permute.xlu0 %277
  %v280 = vadd.f32 %v270, %v278
  %v281 = vtanh.pop %v280
  %283 = vrot.lane.b32.xlu0 %v281, 64
  %v284 = vpop.permute.xlu0 %283
  %v286 = vmul.f32 %v268, %v284
  %288 = vrot.lane.b32.xlu0 %v286, 32
  %v289 = vpop.permute.xlu0 %288
  %v290 = vsel %vm188, %v289, 0
  %292 = vmatprep.subr.mxu0 0.0
  %293 = vmatpush1.msra.mxu0 %v184
  %294 = vmatprep.subr.mxu0 0.0
  %295 = vmatpush1.msra.mxu0 %v185
  %296 = vmatprep.subr.mxu0 0.0
  %297 = vmatpush1.msra.mxu0 %v186
  %298 = vmatprep.subr.mxu0 0.0
  %299 = vmatpush1.msra.mxu0 %v187
  %300 = vmatprep.subr.mxu0 0.0
  %301 = vmatpush1.msra.mxu0 0.0
  %302 = vmatprep.subr.mxu0 0.0
  %303 = vmatpush1.msra.mxu0 0.0
  %304 = vmatprep.subr.mxu0 0.0
  %305 = vmatpush1.msra.mxu0 0.0
  %306 = vmatprep.subr.mxu0 0.0
  %307 = vmatpush1.msra.mxu0 0.0
  %308 = vmatprep.subr.mxu0 0.0
  %309 = vmatpush1.msra.mxu0 0.0
  %310 = vmatprep.subr.mxu0 0.0
  %311 = vmatpush1.msra.mxu0 0.0
  %312 = vmatprep.subr.mxu0 0.0
  %313 = vmatpush1.msra.mxu0 0.0
  %314 = vmatprep.subr.mxu0 0.0
  %315 = vmatpush1.msra.mxu0 0.0
  %316 = vmatprep.subr.mxu0 0.0
  %317 = vmatpush1.msra.mxu0 0.0
  %318 = vmatprep.subr.mxu0 0.0
  %319 = vmatpush1.msra.mxu0 0.0
  %320 = vmatprep.subr.mxu0 0.0
  %321 = vmatpush1.msra.mxu0 0.0
  %322 = vmatprep.subr.mxu0 0.0
  %323 = vmatpush1.msra.mxu0 0.0
  %324 = vmatprep.subr.mxu0 0.0
  %325 = vmatpush1.msra.mxu0 0.0
  %326 = vmatprep.subr.mxu0 0.0
  %327 = vmatpush1.msra.mxu0 0.0
  %328 = vmatprep.subr.mxu0 0.0
  %329 = vmatpush1.msra.mxu0 0.0
  %330 = vmatprep.subr.mxu0 0.0
  %331 = vmatpush1.msra.mxu0 0.0
  %332 = vmatprep.subr.mxu0 0.0
  %333 = vmatpush1.msra.mxu0 0.0
  %334 = vmatprep.subr.mxu0 0.0
  %335 = vmatpush1.msra.mxu0 0.0
  %336 = vmatprep.subr.mxu0 0.0
  %337 = vmatpush1.msra.mxu0 0.0
  %338 = vmatprep.subr.mxu0 0.0
  %339 = vmatpush1.msra.mxu0 0.0
  %340 = vmatprep.subr.mxu0 0.0
  %341 = vmatpush1.msra.mxu0 0.0
  %342 = vmatprep.subr.mxu0 0.0
  %343 = vmatpush1.msra.mxu0 0.0
  %344 = vmatprep.subr.mxu0 0.0
  %345 = vmatpush1.msra.mxu0 0.0
  %346 = vmatprep.subr.mxu0 0.0
  %347 = vmatpush1.msra.mxu0 0.0
  %348 = vmatprep.subr.mxu0 0.0
  %349 = vmatpush1.msra.mxu0 0.0
  %350 = vmatprep.subr.mxu0 0.0
  %351 = vmatpush1.msra.mxu0 0.0
  %352 = vmatprep.subr.mxu0 0.0
  %353 = vmatpush1.msra.mxu0 0.0
  %354 = vmatprep.subr.mxu0 0.0
  %355 = vmatpush1.msra.mxu0 0.0
  %356 = vmatprep.mubr.f32.mxu0 0.0
  %357 = vmatmul.mubr.f32.gmra.mrb[0].mxu0 %v290
  %v358 = vpop.f32.mrb[0].mxu0
  %v359 = vadd.f32 0.0, %v358
  %v360 = vpop.f32.mrb[0].mxu0
  %361 = vdwg.mxu0
  %v362 = vadd.f32 %v151, %v359
  %v363 = vxor.u32 %v362, 2147483648
  %v364 = vmul.f32 %v363, 1.442695
  %v365 = vpow.pop %v364
  %v366 = vadd.f32 %v365, 1.0
  %v367 = vrcp.pop %v366
  %v368 = vmul.f32 1.0, %v367
  %v369 = vtanh.pop %v362
  %v370 = vmul.f32 %v368, %v280
  %372 = vrot.lane.b32.xlu0 %v369, 64
  %v373 = vpop.permute.xlu0 %372
  %v375 = vmul.f32 %v368, %v373
  %377 = vrot.lane.b32.xlu0 %v375, 32
  %v378 = vpop.permute.xlu0 %377
  %v380 = vadd.f32 %v370, %v378
  %v381 = vtanh.pop %v380
  %383 = vrot.lane.b32.xlu0 %v381, 64
  %v384 = vpop.permute.xlu0 %383
  %v386 = vmul.f32 %v368, %v384
  %388 = vrot.lane.b32.xlu0 %v386, 32
  %v389 = vpop.permute.xlu0 %388
  %v390 = vsel %vm188, %v389, 0
  %392 = vmatprep.subr.mxu0 0.0
  %393 = vmatpush1.msra.mxu0 %v184
  %394 = vmatprep.subr.mxu0 0.0
  %395 = vmatpush1.msra.mxu0 %v185
  %396 = vmatprep.subr.mxu0 0.0
  %397 = vmatpush1.msra.mxu0 %v186
  %398 = vmatprep.subr.mxu0 0.0
  %399 = vmatpush1.msra.mxu0 %v187
  %400 = vmatprep.subr.mxu0 0.0
  %401 = vmatpush1.msra.mxu0 0.0
  %402 = vmatprep.subr.mxu0 0.0
  %403 = vmatpush1.msra.mxu0 0.0
  %404 = vmatprep.subr.mxu0 0.0
  %405 = vmatpush1.msra.mxu0 0.0
  %406 = vmatprep.subr.mxu0 0.0
  %407 = vmatpush1.msra.mxu0 0.0
  %408 = vmatprep.subr.mxu0 0.0
  %409 = vmatpush1.msra.mxu0 0.0
  %410 = vmatprep.subr.mxu0 0.0
  %411 = vmatpush1.msra.mxu0 0.0
  %412 = vmatprep.subr.mxu0 0.0
  %413 = vmatpush1.msra.mxu0 0.0
  %414 = vmatprep.subr.mxu0 0.0
  %415 = vmatpush1.msra.mxu0 0.0
  %416 = vmatprep.subr.mxu0 0.0
  %417 = vmatpush1.msra.mxu0 0.0
  %418 = vmatprep.subr.mxu0 0.0
  %419 = vmatpush1.msra.mxu0 0.0
  %420 = vmatprep.subr.mxu0 0.0
  %421 = vmatpush1.msra.mxu0 0.0
  %422 = vmatprep.subr.mxu0 0.0
  %423 = vmatpush1.msra.mxu0 0.0
  %424 = vmatprep.subr.mxu0 0.0
  %425 = vmatpush1.msra.mxu0 0.0
  %426 = vmatprep.subr.mxu0 0.0
  %427 = vmatpush1.msra.mxu0 0.0
  %428 = vmatprep.subr.mxu0 0.0
  %429 = vmatpush1.msra.mxu0 0.0
  %430 = vmatprep.subr.mxu0 0.0
  %431 = vmatpush1.msra.mxu0 0.0
  %432 = vmatprep.subr.mxu0 0.0
  %433 = vmatpush1.msra.mxu0 0.0
  %434 = vmatprep.subr.mxu0 0.0
  %435 = vmatpush1.msra.mxu0 0.0
  %436 = vmatprep.subr.mxu0 0.0
  %437 = vmatpush1.msra.mxu0 0.0
  %438 = vmatprep.subr.mxu0 0.0
  %439 = vmatpush1.msra.mxu0 0.0
  %440 = vmatprep.subr.mxu0 0.0
  %441 = vmatpush1.msra.mxu0 0.0
  %442 = vmatprep.subr.mxu0 0.0
  %443 = vmatpush1.msra.mxu0 0.0
  %444 = vmatprep.subr.mxu0 0.0
  %445 = vmatpush1.msra.mxu0 0.0
  %446 = vmatprep.subr.mxu0 0.0
  %447 = vmatpush1.msra.mxu0 0.0
  %448 = vmatprep.subr.mxu0 0.0
  %449 = vmatpush1.msra.mxu0 0.0
  %450 = vmatprep.subr.mxu0 0.0
  %451 = vmatpush1.msra.mxu0 0.0
  %452 = vmatprep.subr.mxu0 0.0
  %453 = vmatpush1.msra.mxu0 0.0
  %454 = vmatprep.subr.mxu0 0.0
  %455 = vmatpush1.msra.mxu0 0.0
  %456 = vmatprep.mubr.f32.mxu0 0.0
  %457 = vmatmul.mubr.f32.gmra.mrb[0].mxu0 %v390
  %v458 = vpop.f32.mrb[0].mxu0
  %v459 = vadd.f32 0.0, %v458
  %v460 = vpop.f32.mrb[0].mxu0
  %461 = vdwg.mxu0
  %v462 = vadd.f32 %v156, %v459
  %v463 = vxor.u32 %v462, 2147483648
  %v464 = vmul.f32 %v463, 1.442695
  %v465 = vpow.pop %v464
  %v466 = vadd.f32 %v465, 1.0
  %v467 = vrcp.pop %v466
  %v468 = vmul.f32 1.0, %v467
  %v469 = vtanh.pop %v462
  %v470 = vmul.f32 %v468, %v380
  %472 = vrot.lane.b32.xlu0 %v469, 64
  %v473 = vpop.permute.xlu0 %472
  %v475 = vmul.f32 %v468, %v473
  %477 = vrot.lane.b32.xlu0 %v475, 32
  %v478 = vpop.permute.xlu0 %477
  %v480 = vadd.f32 %v470, %v478
  %v481 = vtanh.pop %v480
  %483 = vrot.lane.b32.xlu0 %v481, 64
  %v484 = vpop.permute.xlu0 %483
  %v486 = vmul.f32 %v468, %v484
  %488 = vrot.lane.b32.xlu0 %v486, 32
  %v489 = vpop.permute.xlu0 %488
  %v490 = vsel %vm188, %v489, 0
  %492 = vmatprep.subr.mxu0 0.0
  %493 = vmatpush1.msra.mxu0 %v184
  %494 = vmatprep.subr.mxu0 0.0
  %495 = vmatpush1.msra.mxu0 %v185
  %496 = vmatprep.subr.mxu0 0.0
  %497 = vmatpush1.msra.mxu0 %v186
  %498 = vmatprep.subr.mxu0 0.0
  %499 = vmatpush1.msra.mxu0 %v187
  %500 = vmatprep.subr.mxu0 0.0
  %501 = vmatpush1.msra.mxu0 0.0
  %502 = vmatprep.subr.mxu0 0.0
  %503 = vmatpush1.msra.mxu0 0.0
  %504 = vmatprep.subr.mxu0 0.0
  %505 = vmatpush1.msra.mxu0 0.0
  %506 = vmatprep.subr.mxu0 0.0
  %507 = vmatpush1.msra.mxu0 0.0
  %508 = vmatprep.subr.mxu0 0.0
  %509 = vmatpush1.msra.mxu0 0.0
  %510 = vmatprep.subr.mxu0 0.0
  %511 = vmatpush1.msra.mxu0 0.0
  %512 = vmatprep.subr.mxu0 0.0
  %513 = vmatpush1.msra.mxu0 0.0
  %514 = vmatprep.subr.mxu0 0.0
  %515 = vmatpush1.msra.mxu0 0.0
  %516 = vmatprep.subr.mxu0 0.0
  %517 = vmatpush1.msra.mxu0 0.0
  %518 = vmatprep.subr.mxu0 0.0
  %519 = vmatpush1.msra.mxu0 0.0
  %520 = vmatprep.subr.mxu0 0.0
  %521 = vmatpush1.msra.mxu0 0.0
  %522 = vmatprep.subr.mxu0 0.0
  %523 = vmatpush1.msra.mxu0 0.0
  %524 = vmatprep.subr.mxu0 0.0
  %525 = vmatpush1.msra.mxu0 0.0
  %526 = vmatprep.subr.mxu0 0.0
  %527 = vmatpush1.msra.mxu0 0.0
  %528 = vmatprep.subr.mxu0 0.0
  %529 = vmatpush1.msra.mxu0 0.0
  %530 = vmatprep.subr.mxu0 0.0
  %531 = vmatpush1.msra.mxu0 0.0
  %532 = vmatprep.subr.mxu0 0.0
  %533 = vmatpush1.msra.mxu0 0.0
  %534 = vmatprep.subr.mxu0 0.0
  %535 = vmatpush1.msra.mxu0 0.0
  %536 = vmatprep.subr.mxu0 0.0
  %537 = vmatpush1.msra.mxu0 0.0
  %538 = vmatprep.subr.mxu0 0.0
  %539 = vmatpush1.msra.mxu0 0.0
  %540 = vmatprep.subr.mxu0 0.0
  %541 = vmatpush1.msra.mxu0 0.0
  %542 = vmatprep.subr.mxu0 0.0
  %543 = vmatpush1.msra.mxu0 0.0
  %544 = vmatprep.subr.mxu0 0.0
  %545 = vmatpush1.msra.mxu0 0.0
  %546 = vmatprep.subr.mxu0 0.0
  %547 = vmatpush1.msra.mxu0 0.0
  %548 = vmatprep.subr.mxu0 0.0
  %549 = vmatpush1.msra.mxu0 0.0
  %550 = vmatprep.subr.mxu0 0.0
  %551 = vmatpush1.msra.mxu0 0.0
  %552 = vmatprep.subr.mxu0 0.0
  %553 = vmatpush1.msra.mxu0 0.0
  %554 = vmatprep.subr.mxu0 0.0
  %555 = vmatpush1.msra.mxu0 0.0
  %556 = vmatprep.mubr.f32.mxu0 0.0
  %557 = vmatmul.mubr.f32.gmra.mrb[0].mxu0 %v490
  %v558 = vpop.f32.mrb[0].mxu0
  %v559 = vadd.f32 0.0, %v558
  %v560 = vpop.f32.mrb[0].mxu0
  %561 = vdwg.mxu0
  %v562 = vadd.f32 %v161, %v559
  %v563 = vxor.u32 %v562, 2147483648
  %v564 = vmul.f32 %v563, 1.442695
  %v565 = vpow.pop %v564
  %v566 = vadd.f32 %v565, 1.0
  %v567 = vrcp.pop %v566
  %v568 = vmul.f32 1.0, %v567
  %v569 = vtanh.pop %v562
  %v570 = vmul.f32 %v568, %v480
  %572 = vrot.lane.b32.xlu0 %v569, 64
  %v573 = vpop.permute.xlu0 %572
  %v575 = vmul.f32 %v568, %v573
  %577 = vrot.lane.b32.xlu0 %v575, 32
  %v578 = vpop.permute.xlu0 %577
  %v580 = vadd.f32 %v570, %v578
  %v581 = vtanh.pop %v580
  %583 = vrot.lane.b32.xlu0 %v581, 64
  %v584 = vpop.permute.xlu0 %583
  %v586 = vmul.f32 %v568, %v584
  %588 = vrot.lane.b32.xlu0 %v586, 32
  %v589 = vpop.permute.xlu0 %588
  %v590 = vsel %vm188, %v589, 0
  %592 = vmatprep.subr.mxu0 0.0
  %593 = vmatpush1.msra.mxu0 %v184
  %594 = vmatprep.subr.mxu0 0.0
  %595 = vmatpush1.msra.mxu0 %v185
  %596 = vmatprep.subr.mxu0 0.0
  %597 = vmatpush1.msra.mxu0 %v186
  %598 = vmatprep.subr.mxu0 0.0
  %599 = vmatpush1.msra.mxu0 %v187
  %600 = vmatprep.subr.mxu0 0.0
  %601 = vmatpush1.msra.mxu0 0.0
  %602 = vmatprep.subr.mxu0 0.0
  %603 = vmatpush1.msra.mxu0 0.0
  %604 = vmatprep.subr.mxu0 0.0
  %605 = vmatpush1.msra.mxu0 0.0
  %606 = vmatprep.subr.mxu0 0.0
  %607 = vmatpush1.msra.mxu0 0.0
  %608 = vmatprep.subr.mxu0 0.0
  %609 = vmatpush1.msra.mxu0 0.0
  %610 = vmatprep.subr.mxu0 0.0
  %611 = vmatpush1.msra.mxu0 0.0
  %612 = vmatprep.subr.mxu0 0.0
  %613 = vmatpush1.msra.mxu0 0.0
  %614 = vmatprep.subr.mxu0 0.0
  %615 = vmatpush1.msra.mxu0 0.0
  %616 = vmatprep.subr.mxu0 0.0
  %617 = vmatpush1.msra.mxu0 0.0
  %618 = vmatprep.subr.mxu0 0.0
  %619 = vmatpush1.msra.mxu0 0.0
  %620 = vmatprep.subr.mxu0 0.0
  %621 = vmatpush1.msra.mxu0 0.0
  %622 = vmatprep.subr.mxu0 0.0
  %623 = vmatpush1.msra.mxu0 0.0
  %624 = vmatprep.subr.mxu0 0.0
  %625 = vmatpush1.msra.mxu0 0.0
  %626 = vmatprep.subr.mxu0 0.0
  %627 = vmatpush1.msra.mxu0 0.0
  %628 = vmatprep.subr.mxu0 0.0
  %629 = vmatpush1.msra.mxu0 0.0
  %630 = vmatprep.subr.mxu0 0.0
  %631 = vmatpush1.msra.mxu0 0.0
  %632 = vmatprep.subr.mxu0 0.0
  %633 = vmatpush1.msra.mxu0 0.0
  %634 = vmatprep.subr.mxu0 0.0
  %635 = vmatpush1.msra.mxu0 0.0
  %636 = vmatprep.subr.mxu0 0.0
  %637 = vmatpush1.msra.mxu0 0.0
  %638 = vmatprep.subr.mxu0 0.0
  %639 = vmatpush1.msra.mxu0 0.0
  %640 = vmatprep.subr.mxu0 0.0
  %641 = vmatpush1.msra.mxu0 0.0
  %642 = vmatprep.subr.mxu0 0.0
  %643 = vmatpush1.msra.mxu0 0.0
  %644 = vmatprep.subr.mxu0 0.0
  %645 = vmatpush1.msra.mxu0 0.0
  %646 = vmatprep.subr.mxu0 0.0
  %647 = vmatpush1.msra.mxu0 0.0
  %648 = vmatprep.subr.mxu0 0.0
  %649 = vmatpush1.msra.mxu0 0.0
  %650 = vmatprep.subr.mxu0 0.0
  %651 = vmatpush1.msra.mxu0 0.0
  %652 = vmatprep.subr.mxu0 0.0
  %653 = vmatpush1.msra.mxu0 0.0
  %654 = vmatprep.subr.mxu0 0.0
  %655 = vmatpush1.msra.mxu0 0.0
  %656 = vmatprep.mubr.f32.mxu0 0.0
  %657 = vmatmul.mubr.f32.gmra.mrb[0].mxu0 %v590
  %v658 = vpop.f32.mrb[0].mxu0
  %v659 = vadd.f32 0.0, %v658
  %v660 = vpop.f32.mrb[0].mxu0
  %661 = vdwg.mxu0
  %v662 = vadd.f32 %v166, %v659
  %v663 = vxor.u32 %v662, 2147483648
  %v664 = vmul.f32 %v663, 1.442695
  %v665 = vpow.pop %v664
  %v666 = vadd.f32 %v665, 1.0
  %v667 = vrcp.pop %v666
  %v668 = vmul.f32 1.0, %v667
  %v669 = vtanh.pop %v662
  %v670 = vmul.f32 %v668, %v580
  %672 = vrot.lane.b32.xlu0 %v669, 64
  %v673 = vpop.permute.xlu0 %672
  %v675 = vmul.f32 %v668, %v673
  %677 = vrot.lane.b32.xlu0 %v675, 32
  %v678 = vpop.permute.xlu0 %677
  %v680 = vadd.f32 %v670, %v678
  %v681 = vtanh.pop %v680
  %683 = vrot.lane.b32.xlu0 %v681, 64
  %v684 = vpop.permute.xlu0 %683
  %v686 = vmul.f32 %v668, %v684
  %688 = vrot.lane.b32.xlu0 %v686, 32
  %v689 = vpop.permute.xlu0 %688
  %v690 = vsel %vm188, %v689, 0
  %692 = vmatprep.subr.mxu0 0.0
  %693 = vmatpush1.msra.mxu0 %v184
  %694 = vmatprep.subr.mxu0 0.0
  %695 = vmatpush1.msra.mxu0 %v185
  %696 = vmatprep.subr.mxu0 0.0
  %697 = vmatpush1.msra.mxu0 %v186
  %698 = vmatprep.subr.mxu0 0.0
  %699 = vmatpush1.msra.mxu0 %v187
  %700 = vmatprep.subr.mxu0 0.0
  %701 = vmatpush1.msra.mxu0 0.0
  %702 = vmatprep.subr.mxu0 0.0
  %703 = vmatpush1.msra.mxu0 0.0
  %704 = vmatprep.subr.mxu0 0.0
  %705 = vmatpush1.msra.mxu0 0.0
  %706 = vmatprep.subr.mxu0 0.0
  %707 = vmatpush1.msra.mxu0 0.0
  %708 = vmatprep.subr.mxu0 0.0
  %709 = vmatpush1.msra.mxu0 0.0
  %710 = vmatprep.subr.mxu0 0.0
  %711 = vmatpush1.msra.mxu0 0.0
  %712 = vmatprep.subr.mxu0 0.0
  %713 = vmatpush1.msra.mxu0 0.0
  %714 = vmatprep.subr.mxu0 0.0
  %715 = vmatpush1.msra.mxu0 0.0
  %716 = vmatprep.subr.mxu0 0.0
  %717 = vmatpush1.msra.mxu0 0.0
  %718 = vmatprep.subr.mxu0 0.0
  %719 = vmatpush1.msra.mxu0 0.0
  %720 = vmatprep.subr.mxu0 0.0
  %721 = vmatpush1.msra.mxu0 0.0
  %722 = vmatprep.subr.mxu0 0.0
  %723 = vmatpush1.msra.mxu0 0.0
  %724 = vmatprep.subr.mxu0 0.0
  %725 = vmatpush1.msra.mxu0 0.0
  %726 = vmatprep.subr.mxu0 0.0
  %727 = vmatpush1.msra.mxu0 0.0
  %728 = vmatprep.subr.mxu0 0.0
  %729 = vmatpush1.msra.mxu0 0.0
  %730 = vmatprep.subr.mxu0 0.0
  %731 = vmatpush1.msra.mxu0 0.0
  %732 = vmatprep.subr.mxu0 0.0
  %733 = vmatpush1.msra.mxu0 0.0
  %734 = vmatprep.subr.mxu0 0.0
  %735 = vmatpush1.msra.mxu0 0.0
  %736 = vmatprep.subr.mxu0 0.0
  %737 = vmatpush1.msra.mxu0 0.0
  %738 = vmatprep.subr.mxu0 0.0
  %739 = vmatpush1.msra.mxu0 0.0
  %740 = vmatprep.subr.mxu0 0.0
  %741 = vmatpush1.msra.mxu0 0.0
  %742 = vmatprep.subr.mxu0 0.0
  %743 = vmatpush1.msra.mxu0 0.0
  %744 = vmatprep.subr.mxu0 0.0
  %745 = vmatpush1.msra.mxu0 0.0
  %746 = vmatprep.subr.mxu0 0.0
  %747 = vmatpush1.msra.mxu0 0.0
  %748 = vmatprep.subr.mxu0 0.0
  %749 = vmatpush1.msra.mxu0 0.0
  %750 = vmatprep.subr.mxu0 0.0
  %751 = vmatpush1.msra.mxu0 0.0
  %752 = vmatprep.subr.mxu0 0.0
  %753 = vmatpush1.msra.mxu0 0.0
  %754 = vmatprep.subr.mxu0 0.0
  %755 = vmatpush1.msra.mxu0 0.0
  %756 = vmatprep.mubr.f32.mxu0 0.0
  %757 = vmatmul.mubr.f32.gmra.mrb[0].mxu0 %v690
  %v758 = vpop.f32.mrb[0].mxu0
  %v759 = vadd.f32 0.0, %v758
  %v760 = vpop.f32.mrb[0].mxu0
  %761 = vdwg.mxu0
  %v762 = vadd.f32 %v171, %v759
  %v763 = vxor.u32 %v762, 2147483648
  %v764 = vmul.f32 %v763, 1.442695
  %v765 = vpow.pop %v764
  %v766 = vadd.f32 %v765, 1.0
  %v767 = vrcp.pop %v766
  %v768 = vmul.f32 1.0, %v767
  %v769 = vtanh.pop %v762
  %v770 = vmul.f32 %v768, %v680
  %772 = vrot.lane.b32.xlu0 %v769, 64
  %v773 = vpop.permute.xlu0 %772
  %v775 = vmul.f32 %v768, %v773
  %777 = vrot.lane.b32.xlu0 %v775, 32
  %v778 = vpop.permute.xlu0 %777
  %v780 = vadd.f32 %v770, %v778
  %v781 = vtanh.pop %v780
  %783 = vrot.lane.b32.xlu0 %v781, 64
  %v784 = vpop.permute.xlu0 %783
  %v786 = vmul.f32 %v768, %v784
  %788 = vrot.lane.b32.xlu0 %v786, 32
  %v789 = vpop.permute.xlu0 %788
  %v790 = vsel %vm188, %v789, 0
  %792 = vmatprep.subr.mxu0 0.0
  %793 = vmatpush1.msra.mxu0 %v184
  %794 = vmatprep.subr.mxu0 0.0
  %795 = vmatpush1.msra.mxu0 %v185
  %796 = vmatprep.subr.mxu0 0.0
  %797 = vmatpush1.msra.mxu0 %v186
  %798 = vmatprep.subr.mxu0 0.0
  %799 = vmatpush1.msra.mxu0 %v187
  %800 = vmatprep.subr.mxu0 0.0
  %801 = vmatpush1.msra.mxu0 0.0
  %802 = vmatprep.subr.mxu0 0.0
  %803 = vmatpush1.msra.mxu0 0.0
  %804 = vmatprep.subr.mxu0 0.0
  %805 = vmatpush1.msra.mxu0 0.0
  %806 = vmatprep.subr.mxu0 0.0
  %807 = vmatpush1.msra.mxu0 0.0
  %808 = vmatprep.subr.mxu0 0.0
  %809 = vmatpush1.msra.mxu0 0.0
  %810 = vmatprep.subr.mxu0 0.0
  %811 = vmatpush1.msra.mxu0 0.0
  %812 = vmatprep.subr.mxu0 0.0
  %813 = vmatpush1.msra.mxu0 0.0
  %814 = vmatprep.subr.mxu0 0.0
  %815 = vmatpush1.msra.mxu0 0.0
  %816 = vmatprep.subr.mxu0 0.0
  %817 = vmatpush1.msra.mxu0 0.0
  %818 = vmatprep.subr.mxu0 0.0
  %819 = vmatpush1.msra.mxu0 0.0
  %820 = vmatprep.subr.mxu0 0.0
  %821 = vmatpush1.msra.mxu0 0.0
  %822 = vmatprep.subr.mxu0 0.0
  %823 = vmatpush1.msra.mxu0 0.0
  %824 = vmatprep.subr.mxu0 0.0
  %825 = vmatpush1.msra.mxu0 0.0
  %826 = vmatprep.subr.mxu0 0.0
  %827 = vmatpush1.msra.mxu0 0.0
  %828 = vmatprep.subr.mxu0 0.0
  %829 = vmatpush1.msra.mxu0 0.0
  %830 = vmatprep.subr.mxu0 0.0
  %831 = vmatpush1.msra.mxu0 0.0
  %832 = vmatprep.subr.mxu0 0.0
  %833 = vmatpush1.msra.mxu0 0.0
  %834 = vmatprep.subr.mxu0 0.0
  %835 = vmatpush1.msra.mxu0 0.0
  %836 = vmatprep.subr.mxu0 0.0
  %837 = vmatpush1.msra.mxu0 0.0
  %838 = vmatprep.subr.mxu0 0.0
  %839 = vmatpush1.msra.mxu0 0.0
  %840 = vmatprep.subr.mxu0 0.0
  %841 = vmatpush1.msra.mxu0 0.0
  %842 = vmatprep.subr.mxu0 0.0
  %843 = vmatpush1.msra.mxu0 0.0
  %844 = vmatprep.subr.mxu0 0.0
  %845 = vmatpush1.msra.mxu0 0.0
  %846 = vmatprep.subr.mxu0 0.0
  %847 = vmatpush1.msra.mxu0 0.0
  %848 = vmatprep.subr.mxu0 0.0
  %849 = vmatpush1.msra.mxu0 0.0
  %850 = vmatprep.subr.mxu0 0.0
  %851 = vmatpush1.msra.mxu0 0.0
  %852 = vmatprep.subr.mxu0 0.0
  %853 = vmatpush1.msra.mxu0 0.0
  %854 = vmatprep.subr.mxu0 0.0
  %855 = vmatpush1.msra.mxu0 0.0
  %856 = vmatprep.mubr.f32.mxu0 0.0
  %857 = vmatmul.mubr.f32.gmra.mrb[0].mxu0 %v790
  %v858 = vpop.f32.mrb[0].mxu0
  %v859 = vadd.f32 0.0, %v858
  %v860 = vpop.f32.mrb[0].mxu0
  %861 = vdwg.mxu0
  %v862 = vadd.f32 %v176, %v859
  %v863 = vxor.u32 %v862, 2147483648
  %v864 = vmul.f32 %v863, 1.442695
  %v865 = vpow.pop %v864
  %v866 = vadd.f32 %v865, 1.0
  %v867 = vrcp.pop %v866
  %v868 = vmul.f32 1.0, %v867
  %v869 = vtanh.pop %v862
  %v870 = vmul.f32 %v868, %v780
  %872 = vrot.lane.b32.xlu0 %v869, 64
  %v873 = vpop.permute.xlu0 %872
  %v875 = vmul.f32 %v868, %v873
  %877 = vrot.lane.b32.xlu0 %v875, 32
  %v878 = vpop.permute.xlu0 %877
  %v880 = vadd.f32 %v870, %v878
  %v881 = vtanh.pop %v880
  %883 = vrot.lane.b32.xlu0 %v881, 64
  %v884 = vpop.permute.xlu0 %883
  %v886 = vmul.f32 %v868, %v884
  %888 = vrot.lane.b32.xlu0 %v886, 32
  %v889 = vpop.permute.xlu0 %888
  %v890 = vsel %vm188, %v889, 0
  %892 = vmatprep.subr.mxu0 0.0
  %893 = vmatpush1.msra.mxu0 %v184
  %894 = vmatprep.subr.mxu0 0.0
  %895 = vmatpush1.msra.mxu0 %v185
  %896 = vmatprep.subr.mxu0 0.0
  %897 = vmatpush1.msra.mxu0 %v186
  %898 = vmatprep.subr.mxu0 0.0
  %899 = vmatpush1.msra.mxu0 %v187
  %900 = vmatprep.subr.mxu0 0.0
  %901 = vmatpush1.msra.mxu0 0.0
  %902 = vmatprep.subr.mxu0 0.0
  %903 = vmatpush1.msra.mxu0 0.0
  %904 = vmatprep.subr.mxu0 0.0
  %905 = vmatpush1.msra.mxu0 0.0
  %906 = vmatprep.subr.mxu0 0.0
  %907 = vmatpush1.msra.mxu0 0.0
  %908 = vmatprep.subr.mxu0 0.0
  %909 = vmatpush1.msra.mxu0 0.0
  %910 = vmatprep.subr.mxu0 0.0
  %911 = vmatpush1.msra.mxu0 0.0
  %912 = vmatprep.subr.mxu0 0.0
  %913 = vmatpush1.msra.mxu0 0.0
  %914 = vmatprep.subr.mxu0 0.0
  %915 = vmatpush1.msra.mxu0 0.0
  %916 = vmatprep.subr.mxu0 0.0
  %917 = vmatpush1.msra.mxu0 0.0
  %918 = vmatprep.subr.mxu0 0.0
  %919 = vmatpush1.msra.mxu0 0.0
  %920 = vmatprep.subr.mxu0 0.0
  %921 = vmatpush1.msra.mxu0 0.0
  %922 = vmatprep.subr.mxu0 0.0
  %923 = vmatpush1.msra.mxu0 0.0
  %924 = vmatprep.subr.mxu0 0.0
  %925 = vmatpush1.msra.mxu0 0.0
  %926 = vmatprep.subr.mxu0 0.0
  %927 = vmatpush1.msra.mxu0 0.0
  %928 = vmatprep.subr.mxu0 0.0
  %929 = vmatpush1.msra.mxu0 0.0
  %930 = vmatprep.subr.mxu0 0.0
  %931 = vmatpush1.msra.mxu0 0.0
  %932 = vmatprep.subr.mxu0 0.0
  %933 = vmatpush1.msra.mxu0 0.0
  %934 = vmatprep.subr.mxu0 0.0
  %935 = vmatpush1.msra.mxu0 0.0
  %936 = vmatprep.subr.mxu0 0.0
  %937 = vmatpush1.msra.mxu0 0.0
  %938 = vmatprep.subr.mxu0 0.0
  %939 = vmatpush1.msra.mxu0 0.0
  %940 = vmatprep.subr.mxu0 0.0
  %941 = vmatpush1.msra.mxu0 0.0
  %942 = vmatprep.subr.mxu0 0.0
  %943 = vmatpush1.msra.mxu0 0.0
  %944 = vmatprep.subr.mxu0 0.0
  %945 = vmatpush1.msra.mxu0 0.0
  %946 = vmatprep.subr.mxu0 0.0
  %947 = vmatpush1.msra.mxu0 0.0
  %948 = vmatprep.subr.mxu0 0.0
  %949 = vmatpush1.msra.mxu0 0.0
  %950 = vmatprep.subr.mxu0 0.0
  %951 = vmatpush1.msra.mxu0 0.0
  %952 = vmatprep.subr.mxu0 0.0
  %953 = vmatpush1.msra.mxu0 0.0
  %954 = vmatprep.subr.mxu0 0.0
  %955 = vmatpush1.msra.mxu0 0.0
  %956 = vmatprep.mubr.f32.mxu0 0.0
  %957 = vmatmul.mubr.f32.gmra.mrb[0].mxu0 %v890
  %v958 = vpop.f32.mrb[0].mxu0
  %v959 = vadd.f32 0.0, %v958
  %v960 = vpop.f32.mrb[0].mxu0
  %961 = vdwg.mxu0
  %v962 = vadd.f32 %v181, %v959
  %v963 = vxor.u32 %v962, 2147483648
  %v964 = vmul.f32 %v963, 1.442695
  %v965 = vpow.pop %v964
  %v966 = vadd.f32 %v965, 1.0
  %v967 = vrcp.pop %v966
  %v968 = vmul.f32 1.0, %v967
  %v969 = vtanh.pop %v962
  %v970 = vmul.f32 %v968, %v880
  %972 = vrot.lane.b32.xlu0 %v969, 64
  %v973 = vpop.permute.xlu0 %972
  %v975 = vmul.f32 %v968, %v973
  %977 = vrot.lane.b32.xlu0 %v975, 32
  %v978 = vpop.permute.xlu0 %977
  %v980 = vadd.f32 %v970, %v978
  %v981 = vtanh.pop %v980
  %983 = vrot.lane.b32.xlu0 %v981, 64
  %v984 = vpop.permute.xlu0 %983
  %v986 = vmul.f32 %v968, %v984
  %v987 = vld [vmem:[%s4] sm:$0xff]
  %v988 = vld [vmem:[%s4 + $0x8] sm:$0xff]
  %v989 = vld [vmem:[%s4 + $0x10] sm:$0xff]
  %v990 = vld [vmem:[%s4 + $0x18] sm:$0xff]
  %v991 = vld [vmem:[%s5] sm:$0x1]
  %v993 = vlaneseq
  %v994 = vshrl.u32 %v993, 7
  %v995 = vsub.s32 0, %v994
  %v996 = vrot.slane %v991, %v995
  %999 = vrot.lane.b32.xlu0 %v986, 32
  %v1000 = vpop.permute.xlu0 %999
  %v1001 = vsel %vm188, %v1000, 0
  %1003 = vmatprep.subr.mxu0 0.0
  %1004 = vmatpush1.msra.mxu0 %v987
  %1005 = vmatprep.subr.mxu0 0.0
  %1006 = vmatpush1.msra.mxu0 %v988
  %1007 = vmatprep.subr.mxu0 0.0
  %1008 = vmatpush1.msra.mxu0 %v989
  %1009 = vmatprep.subr.mxu0 0.0
  %1010 = vmatpush1.msra.mxu0 %v990
  %1011 = vmatprep.subr.mxu0 0.0
  %1012 = vmatpush1.msra.mxu0 0.0
  %1013 = vmatprep.subr.mxu0 0.0
  %1014 = vmatpush1.msra.mxu0 0.0
  %1015 = vmatprep.subr.mxu0 0.0
  %1016 = vmatpush1.msra.mxu0 0.0
  %1017 = vmatprep.subr.mxu0 0.0
  %1018 = vmatpush1.msra.mxu0 0.0
  %1019 = vmatprep.subr.mxu0 0.0
  %1020 = vmatpush1.msra.mxu0 0.0
  %1021 = vmatprep.subr.mxu0 0.0
  %1022 = vmatpush1.msra.mxu0 0.0
  %1023 = vmatprep.subr.mxu0 0.0
  %1024 = vmatpush1.msra.mxu0 0.0
  %1025 = vmatprep.subr.mxu0 0.0
  %1026 = vmatpush1.msra.mxu0 0.0
  %1027 = vmatprep.subr.mxu0 0.0
  %1028 = vmatpush1.msra.mxu0 0.0
  %1029 = vmatprep.subr.mxu0 0.0
  %1030 = vmatpush1.msra.mxu0 0.0
  %1031 = vmatprep.subr.mxu0 0.0
  %1032 = vmatpush1.msra.mxu0 0.0
  %1033 = vmatprep.subr.mxu0 0.0
  %1034 = vmatpush1.msra.mxu0 0.0
  %1035 = vmatprep.subr.mxu0 0.0
  %1036 = vmatpush1.msra.mxu0 0.0
  %1037 = vmatprep.subr.mxu0 0.0
  %1038 = vmatpush1.msra.mxu0 0.0
  %1039 = vmatprep.subr.mxu0 0.0
  %1040 = vmatpush1.msra.mxu0 0.0
  %1041 = vmatprep.subr.mxu0 0.0
  %1042 = vmatpush1.msra.mxu0 0.0
  %1043 = vmatprep.subr.mxu0 0.0
  %1044 = vmatpush1.msra.mxu0 0.0
  %1045 = vmatprep.subr.mxu0 0.0
  %1046 = vmatpush1.msra.mxu0 0.0
  %1047 = vmatprep.subr.mxu0 0.0
  %1048 = vmatpush1.msra.mxu0 0.0
  %1049 = vmatprep.subr.mxu0 0.0
  %1050 = vmatpush1.msra.mxu0 0.0
  %1051 = vmatprep.subr.mxu0 0.0
  %1052 = vmatpush1.msra.mxu0 0.0
  %1053 = vmatprep.subr.mxu0 0.0
  %1054 = vmatpush1.msra.mxu0 0.0
  %1055 = vmatprep.subr.mxu0 0.0
  %1056 = vmatpush1.msra.mxu0 0.0
  %1057 = vmatprep.subr.mxu0 0.0
  %1058 = vmatpush1.msra.mxu0 0.0
  %1059 = vmatprep.subr.mxu0 0.0
  %1060 = vmatpush1.msra.mxu0 0.0
  %1061 = vmatprep.subr.mxu0 0.0
  %1062 = vmatpush1.msra.mxu0 0.0
  %1063 = vmatprep.subr.mxu0 0.0
  %1064 = vmatpush1.msra.mxu0 0.0
  %1065 = vmatprep.subr.mxu0 0.0
  %1066 = vmatpush1.msra.mxu0 0.0
  %1067 = vmatprep.mubr.f32.mxu0 0.0
  %1068 = vmatmul.mubr.f32.gmra.mrb[0].mxu0 %v1001
  %v1069 = vpop.f32.mrb[0].mxu0
  %v1070 = vadd.f32 %v996, %v1069
  %v1071 = vpop.f32.mrb[0].mxu0
  %1072 = vdwg.mxu0
  %v1073 = vld [vmem:[%s6] sm:$0xff]
  %v1074 = vld [vmem:[%s6 + $0x8] sm:$0xff]
  %v1075 = vld [vmem:[%s8] sm:$0x1]
  %v1077 = vlaneseq
  %v1078 = vshrl.u32 %v1077, 7
  %v1079 = vsub.s32 0, %v1078
  %v1080 = vrot.slane %v1075, %v1079
  %vm1082 = vcmask 130048
  %v1084 = vsel %vm1082, %v1070, 0
  %1086 = vmatprep.subr.mxu0 0.0
  %1087 = vmatpush1.msra.mxu0 %v1073
  %1088 = vmatprep.subr.mxu0 0.0
  %1089 = vmatpush1.msra.mxu0 %v1074
  %1090 = vmatprep.subr.mxu0 0.0
  %1091 = vmatpush1.msra.mxu0 0.0
  %1092 = vmatprep.subr.mxu0 0.0
  %1093 = vmatpush1.msra.mxu0 0.0
  %1094 = vmatprep.subr.mxu0 0.0
  %1095 = vmatpush1.msra.mxu0 0.0
  %1096 = vmatprep.subr.mxu0 0.0
  %1097 = vmatpush1.msra.mxu0 0.0
  %1098 = vmatprep.subr.mxu0 0.0
  %1099 = vmatpush1.msra.mxu0 0.0
  %1100 = vmatprep.subr.mxu0 0.0
  %1101 = vmatpush1.msra.mxu0 0.0
  %1102 = vmatprep.subr.mxu0 0.0
  %1103 = vmatpush1.msra.mxu0 0.0
  %1104 = vmatprep.subr.mxu0 0.0
  %1105 = vmatpush1.msra.mxu0 0.0
  %1106 = vmatprep.subr.mxu0 0.0
  %1107 = vmatpush1.msra.mxu0 0.0
  %1108 = vmatprep.subr.mxu0 0.0
  %1109 = vmatpush1.msra.mxu0 0.0
  %1110 = vmatprep.subr.mxu0 0.0
  %1111 = vmatpush1.msra.mxu0 0.0
  %1112 = vmatprep.subr.mxu0 0.0
  %1113 = vmatpush1.msra.mxu0 0.0
  %1114 = vmatprep.subr.mxu0 0.0
  %1115 = vmatpush1.msra.mxu0 0.0
  %1116 = vmatprep.subr.mxu0 0.0
  %1117 = vmatpush1.msra.mxu0 0.0
  %1118 = vmatprep.subr.mxu0 0.0
  %1119 = vmatpush1.msra.mxu0 0.0
  %1120 = vmatprep.subr.mxu0 0.0
  %1121 = vmatpush1.msra.mxu0 0.0
  %1122 = vmatprep.subr.mxu0 0.0
  %1123 = vmatpush1.msra.mxu0 0.0
  %1124 = vmatprep.subr.mxu0 0.0
  %1125 = vmatpush1.msra.mxu0 0.0
  %1126 = vmatprep.subr.mxu0 0.0
  %1127 = vmatpush1.msra.mxu0 0.0
  %1128 = vmatprep.subr.mxu0 0.0
  %1129 = vmatpush1.msra.mxu0 0.0
  %1130 = vmatprep.subr.mxu0 0.0
  %1131 = vmatpush1.msra.mxu0 0.0
  %1132 = vmatprep.subr.mxu0 0.0
  %1133 = vmatpush1.msra.mxu0 0.0
  %1134 = vmatprep.subr.mxu0 0.0
  %1135 = vmatpush1.msra.mxu0 0.0
  %1136 = vmatprep.subr.mxu0 0.0
  %1137 = vmatpush1.msra.mxu0 0.0
  %1138 = vmatprep.subr.mxu0 0.0
  %1139 = vmatpush1.msra.mxu0 0.0
  %1140 = vmatprep.subr.mxu0 0.0
  %1141 = vmatpush1.msra.mxu0 0.0
  %1142 = vmatprep.subr.mxu0 0.0
  %1143 = vmatpush1.msra.mxu0 0.0
  %1144 = vmatprep.subr.mxu0 0.0
  %1145 = vmatpush1.msra.mxu0 0.0
  %1146 = vmatprep.subr.mxu0 0.0
  %1147 = vmatpush1.msra.mxu0 0.0
  %1148 = vmatprep.subr.mxu0 0.0
  %1149 = vmatpush1.msra.mxu0 0.0
  %1150 = vmatprep.mubr.f32.mxu0 0.0
  %1151 = vmatmul.mubr.f32.gmra.mrb[0].mxu0 %v1084
  %v1152 = vpop.f32.mrb[0].mxu0
  %v1153 = vadd.f32 %v1080, %v1152
  %v1154 = vpop.f32.mrb[0].mxu0
  %1155 = vdwg.mxu0
  %v1156 = vld [vmem:[%s7] sm:$0xff]
  %v1157 = vld [vmem:[%s7 + $0x8] sm:$0xff]
  %v1158 = vld [vmem:[%s7 + $0x10] sm:$0xff]
  %v1159 = vld [vmem:[%s7 + $0x18] sm:$0xff]
  %1160 = vmatprep.subr.mxu0 0.0
  %1161 = vmatpush1.msra.mxu0 %v1156
  %1162 = vmatprep.subr.mxu0 0.0
  %1163 = vmatpush1.msra.mxu0 %v1157
  %1164 = vmatprep.subr.mxu0 0.0
  %1165 = vmatpush1.msra.mxu0 %v1158
  %1166 = vmatprep.subr.mxu0 0.0
  %1167 = vmatpush1.msra.mxu0 %v1159
  %1168 = vmatprep.subr.mxu0 0.0
  %1169 = vmatpush1.msra.mxu0 0.0
  %1170 = vmatprep.subr.mxu0 0.0
  %1171 = vmatpush1.msra.mxu0 0.0
  %1172 = vmatprep.subr.mxu0 0.0
  %1173 = vmatpush1.msra.mxu0 0.0
  %1174 = vmatprep.subr.mxu0 0.0
  %1175 = vmatpush1.msra.mxu0 0.0
  %1176 = vmatprep.subr.mxu0 0.0
  %1177 = vmatpush1.msra.mxu0 0.0
  %1178 = vmatprep.subr.mxu0 0.0
  %1179 = vmatpush1.msra.mxu0 0.0
  %1180 = vmatprep.subr.mxu0 0.0
  %1181 = vmatpush1.msra.mxu0 0.0
  %1182 = vmatprep.subr.mxu0 0.0
  %1183 = vmatpush1.msra.mxu0 0.0
  %1184 = vmatprep.subr.mxu0 0.0
  %1185 = vmatpush1.msra.mxu0 0.0
  %1186 = vmatprep.subr.mxu0 0.0
  %1187 = vmatpush1.msra.mxu0 0.0
  %1188 = vmatprep.subr.mxu0 0.0
  %1189 = vmatpush1.msra.mxu0 0.0
  %1190 = vmatprep.subr.mxu0 0.0
  %1191 = vmatpush1.msra.mxu0 0.0
  %1192 = vmatprep.subr.mxu0 0.0
  %1193 = vmatpush1.msra.mxu0 0.0
  %1194 = vmatprep.subr.mxu0 0.0
  %1195 = vmatpush1.msra.mxu0 0.0
  %1196 = vmatprep.subr.mxu0 0.0
  %1197 = vmatpush1.msra.mxu0 0.0
  %1198 = vmatprep.subr.mxu0 0.0
  %1199 = vmatpush1.msra.mxu0 0.0
  %1200 = vmatprep.subr.mxu0 0.0
  %1201 = vmatpush1.msra.mxu0 0.0
  %1202 = vmatprep.subr.mxu0 0.0
  %1203 = vmatpush1.msra.mxu0 0.0
  %1204 = vmatprep.subr.mxu0 0.0
  %1205 = vmatpush1.msra.mxu0 0.0
  %1206 = vmatprep.subr.mxu0 0.0
  %1207 = vmatpush1.msra.mxu0 0.0
  %1208 = vmatprep.subr.mxu0 0.0
  %1209 = vmatpush1.msra.mxu0 0.0
  %1210 = vmatprep.subr.mxu0 0.0
  %1211 = vmatpush1.msra.mxu0 0.0
  %1212 = vmatprep.subr.mxu0 0.0
  %1213 = vmatpush1.msra.mxu0 0.0
  %1214 = vmatprep.subr.mxu0 0.0
  %1215 = vmatpush1.msra.mxu0 0.0
  %1216 = vmatprep.subr.mxu0 0.0
  %1217 = vmatpush1.msra.mxu0 0.0
  %1218 = vmatprep.subr.mxu0 0.0
  %1219 = vmatpush1.msra.mxu0 0.0
  %1220 = vmatprep.subr.mxu0 0.0
  %1221 = vmatpush1.msra.mxu0 0.0
  %1222 = vmatprep.subr.mxu0 0.0
  %1223 = vmatpush1.msra.mxu0 0.0
  %1224 = vmatprep.mubr.f32.mxu0 0.0
  %1225 = vmatmul.mubr.f32.gmra.mrb[0].mxu0 %v190
  %v1226 = vpop.f32.mrb[0].mxu0
  %v1227 = vadd.f32 0.0, %v1226
  %v1228 = vpop.f32.mrb[0].mxu0
  %1229 = vdwg.mxu0
  %v1230 = vadd.f32 %v1153, %v1227
  %v1231 = vxor.u32 %v1230, 2147483648
  %v1232 = vmul.f32 %v1231, 1.442695
  %v1233 = vpow.pop %v1232
  %v1234 = vadd.f32 %v1233, 1.0
  %v1235 = vrcp.pop %v1234
  %v1236 = vmul.f32 1.0, %v1235
  %v1237 = vtanh.pop %v1230
  %v1238 = vmul.f32 %v1236, 0.0
  %1240 = vrot.lane.b32.xlu0 %v1237, 64
  %v1241 = vpop.permute.xlu0 %1240
  %v1243 = vmul.f32 %v1236, %v1241
  %1245 = vrot.lane.b32.xlu0 %v1243, 32
  %v1246 = vpop.permute.xlu0 %1245
  %v1248 = vadd.f32 %v1238, %v1246
  %v1249 = vtanh.pop %v1248
  %1251 = vrot.lane.b32.xlu0 %v1249, 64
  %v1252 = vpop.permute.xlu0 %1251
  %v1254 = vmul.f32 %v1236, %v1252
  %1256 = vrot.lane.b32.xlu0 %v1254, 32
  %v1257 = vpop.permute.xlu0 %1256
  %v1258 = vsel %vm188, %v1257, 0
  %1260 = vmatprep.subr.mxu0 0.0
  %1261 = vmatpush1.msra.mxu0 %v1156
  %1262 = vmatprep.subr.mxu0 0.0
  %1263 = vmatpush1.msra.mxu0 %v1157
  %1264 = vmatprep.subr.mxu0 0.0
  %1265 = vmatpush1.msra.mxu0 %v1158
  %1266 = vmatprep.subr.mxu0 0.0
  %1267 = vmatpush1.msra.mxu0 %v1159
  %1268 = vmatprep.subr.mxu0 0.0
  %1269 = vmatpush1.msra.mxu0 0.0
  %1270 = vmatprep.subr.mxu0 0.0
  %1271 = vmatpush1.msra.mxu0 0.0
  %1272 = vmatprep.subr.mxu0 0.0
  %1273 = vmatpush1.msra.mxu0 0.0
  %1274 = vmatprep.subr.mxu0 0.0
  %1275 = vmatpush1.msra.mxu0 0.0
  %1276 = vmatprep.subr.mxu0 0.0
  %1277 = vmatpush1.msra.mxu0 0.0
  %1278 = vmatprep.subr.mxu0 0.0
  %1279 = vmatpush1.msra.mxu0 0.0
  %1280 = vmatprep.subr.mxu0 0.0
  %1281 = vmatpush1.msra.mxu0 0.0
  %1282 = vmatprep.subr.mxu0 0.0
  %1283 = vmatpush1.msra.mxu0 0.0
  %1284 = vmatprep.subr.mxu0 0.0
  %1285 = vmatpush1.msra.mxu0 0.0
  %1286 = vmatprep.subr.mxu0 0.0
  %1287 = vmatpush1.msra.mxu0 0.0
  %1288 = vmatprep.subr.mxu0 0.0
  %1289 = vmatpush1.msra.mxu0 0.0
  %1290 = vmatprep.subr.mxu0 0.0
  %1291 = vmatpush1.msra.mxu0 0.0
  %1292 = vmatprep.subr.mxu0 0.0
  %1293 = vmatpush1.msra.mxu0 0.0
  %1294 = vmatprep.subr.mxu0 0.0
  %1295 = vmatpush1.msra.mxu0 0.0
  %1296 = vmatprep.subr.mxu0 0.0
  %1297 = vmatpush1.msra.mxu0 0.0
  %1298 = vmatprep.subr.mxu0 0.0
  %1299 = vmatpush1.msra.mxu0 0.0
  %1300 = vmatprep.subr.mxu0 0.0
  %1301 = vmatpush1.msra.mxu0 0.0
  %1302 = vmatprep.subr.mxu0 0.0
  %1303 = vmatpush1.msra.mxu0 0.0
  %1304 = vmatprep.subr.mxu0 0.0
  %1305 = vmatpush1.msra.mxu0 0.0
  %1306 = vmatprep.subr.mxu0 0.0
  %1307 = vmatpush1.msra.mxu0 0.0
  %1308 = vmatprep.subr.mxu0 0.0
  %1309 = vmatpush1.msra.mxu0 0.0
  %1310 = vmatprep.subr.mxu0 0.0
  %1311 = vmatpush1.msra.mxu0 0.0
  %1312 = vmatprep.subr.mxu0 0.0
  %1313 = vmatpush1.msra.mxu0 0.0
  %1314 = vmatprep.subr.mxu0 0.0
  %1315 = vmatpush1.msra.mxu0 0.0
  %1316 = vmatprep.subr.mxu0 0.0
  %1317 = vmatpush1.msra.mxu0 0.0
  %1318 = vmatprep.subr.mxu0 0.0
  %1319 = vmatpush1.msra.mxu0 0.0
  %1320 = vmatprep.subr.mxu0 0.0
  %1321 = vmatpush1.msra.mxu0 0.0
  %1322 = vmatprep.subr.mxu0 0.0
  %1323 = vmatpush1.msra.mxu0 0.0
  %1324 = vmatprep.mubr.f32.mxu0 0.0
  %1325 = vmatmul.mubr.f32.gmra.mrb[0].mxu0 %v1258
  %v1326 = vpop.f32.mrb[0].mxu0
  %v1327 = vadd.f32 0.0, %v1326
  %v1328 = vpop.f32.mrb[0].mxu0
  %1329 = vdwg.mxu0
  %v1330 = vadd.f32 %v1153, %v1327
  %v1331 = vxor.u32 %v1330, 2147483648
  %v1332 = vmul.f32 %v1331, 1.442695
  %v1333 = vpow.pop %v1332
  %v1334 = vadd.f32 %v1333, 1.0
  %v1335 = vrcp.pop %v1334
  %v1336 = vmul.f32 1.0, %v1335
  %v1337 = vtanh.pop %v1330
  %v1338 = vmul.f32 %v1336, %v1248
  %1340 = vrot.lane.b32.xlu0 %v1337, 64
  %v1341 = vpop.permute.xlu0 %1340
  %v1343 = vmul.f32 %v1336, %v1341
  %1345 = vrot.lane.b32.xlu0 %v1343, 32
  %v1346 = vpop.permute.xlu0 %1345
  %v1348 = vadd.f32 %v1338, %v1346
  %v1349 = vtanh.pop %v1348
  %1351 = vrot.lane.b32.xlu0 %v1349, 64
  %v1352 = vpop.permute.xlu0 %1351
  %v1354 = vmul.f32 %v1336, %v1352
  %1356 = vrot.lane.b32.xlu0 %v1354, 32
  %v1357 = vpop.permute.xlu0 %1356
  %v1358 = vsel %vm188, %v1357, 0
  %1360 = vmatprep.subr.mxu0 0.0
  %1361 = vmatpush1.msra.mxu0 %v1156
  %1362 = vmatprep.subr.mxu0 0.0
  %1363 = vmatpush1.msra.mxu0 %v1157
  %1364 = vmatprep.subr.mxu0 0.0
  %1365 = vmatpush1.msra.mxu0 %v1158
  %1366 = vmatprep.subr.mxu0 0.0
  %1367 = vmatpush1.msra.mxu0 %v1159
  %1368 = vmatprep.subr.mxu0 0.0
  %1369 = vmatpush1.msra.mxu0 0.0
  %1370 = vmatprep.subr.mxu0 0.0
  %1371 = vmatpush1.msra.mxu0 0.0
  %1372 = vmatprep.subr.mxu0 0.0
  %1373 = vmatpush1.msra.mxu0 0.0
  %1374 = vmatprep.subr.mxu0 0.0
  %1375 = vmatpush1.msra.mxu0 0.0
  %1376 = vmatprep.subr.mxu0 0.0
  %1377 = vmatpush1.msra.mxu0 0.0
  %1378 = vmatprep.subr.mxu0 0.0
  %1379 = vmatpush1.msra.mxu0 0.0
  %1380 = vmatprep.subr.mxu0 0.0
  %1381 = vmatpush1.msra.mxu0 0.0
  %1382 = vmatprep.subr.mxu0 0.0
  %1383 = vmatpush1.msra.mxu0 0.0
  %1384 = vmatprep.subr.mxu0 0.0
  %1385 = vmatpush1.msra.mxu0 0.0
  %1386 = vmatprep.subr.mxu0 0.0
  %1387 = vmatpush1.msra.mxu0 0.0
  %1388 = vmatprep.subr.mxu0 0.0
  %1389 = vmatpush1.msra.mxu0 0.0
  %1390 = vmatprep.subr.mxu0 0.0
  %1391 = vmatpush1.msra.mxu0 0.0
  %1392 = vmatprep.subr.mxu0 0.0
  %1393 = vmatpush1.msra.mxu0 0.0
  %1394 = vmatprep.subr.mxu0 0.0
  %1395 = vmatpush1.msra.mxu0 0.0
  %1396 = vmatprep.subr.mxu0 0.0
  %1397 = vmatpush1.msra.mxu0 0.0
  %1398 = vmatprep.subr.mxu0 0.0
  %1399 = vmatpush1.msra.mxu0 0.0
  %1400 = vmatprep.subr.mxu0 0.0
  %1401 = vmatpush1.msra.mxu0 0.0
  %1402 = vmatprep.subr.mxu0 0.0
  %1403 = vmatpush1.msra.mxu0 0.0
  %1404 = vmatprep.subr.mxu0 0.0
  %1405 = vmatpush1.msra.mxu0 0.0
  %1406 = vmatprep.subr.mxu0 0.0
  %1407 = vmatpush1.msra.mxu0 0.0
  %1408 = vmatprep.subr.mxu0 0.0
  %1409 = vmatpush1.msra.mxu0 0.0
  %1410 = vmatprep.subr.mxu0 0.0
  %1411 = vmatpush1.msra.mxu0 0.0
  %1412 = vmatprep.subr.mxu0 0.0
  %1413 = vmatpush1.msra.mxu0 0.0
  %1414 = vmatprep.subr.mxu0 0.0
  %1415 = vmatpush1.msra.mxu0 0.0
  %1416 = vmatprep.subr.mxu0 0.0
  %1417 = vmatpush1.msra.mxu0 0.0
  %1418 = vmatprep.subr.mxu0 0.0
  %1419 = vmatpush1.msra.mxu0 0.0
  %1420 = vmatprep.subr.mxu0 0.0
  %1421 = vmatpush1.msra.mxu0 0.0
  %1422 = vmatprep.subr.mxu0 0.0
  %1423 = vmatpush1.msra.mxu0 0.0
  %1424 = vmatprep.mubr.f32.mxu0 0.0
  %1425 = vmatmul.mubr.f32.gmra.mrb[0].mxu0 %v1358
  %v1426 = vpop.f32.mrb[0].mxu0
  %v1427 = vadd.f32 0.0, %v1426
  %v1428 = vpop.f32.mrb[0].mxu0
  %1429 = vdwg.mxu0
  %v1430 = vadd.f32 %v1153, %v1427
  %v1431 = vxor.u32 %v1430, 2147483648
  %v1432 = vmul.f32 %v1431, 1.442695
  %v1433 = vpow.pop %v1432
  %v1434 = vadd.f32 %v1433, 1.0
  %v1435 = vrcp.pop %v1434
  %v1436 = vmul.f32 1.0, %v1435
  %v1437 = vtanh.pop %v1430
  %v1438 = vmul.f32 %v1436, %v1348
  %1440 = vrot.lane.b32.xlu0 %v1437, 64
  %v1441 = vpop.permute.xlu0 %1440
  %v1443 = vmul.f32 %v1436, %v1441
  %1445 = vrot.lane.b32.xlu0 %v1443, 32
  %v1446 = vpop.permute.xlu0 %1445
  %v1448 = vadd.f32 %v1438, %v1446
  %v1449 = vtanh.pop %v1448
  %1451 = vrot.lane.b32.xlu0 %v1449, 64
  %v1452 = vpop.permute.xlu0 %1451
  %v1454 = vmul.f32 %v1436, %v1452
  %1456 = vrot.lane.b32.xlu0 %v1454, 32
  %v1457 = vpop.permute.xlu0 %1456
  %v1458 = vsel %vm188, %v1457, 0
  %1460 = vmatprep.subr.mxu0 0.0
  %1461 = vmatpush1.msra.mxu0 %v1156
  %1462 = vmatprep.subr.mxu0 0.0
  %1463 = vmatpush1.msra.mxu0 %v1157
  %1464 = vmatprep.subr.mxu0 0.0
  %1465 = vmatpush1.msra.mxu0 %v1158
  %1466 = vmatprep.subr.mxu0 0.0
  %1467 = vmatpush1.msra.mxu0 %v1159
  %1468 = vmatprep.subr.mxu0 0.0
  %1469 = vmatpush1.msra.mxu0 0.0
  %1470 = vmatprep.subr.mxu0 0.0
  %1471 = vmatpush1.msra.mxu0 0.0
  %1472 = vmatprep.subr.mxu0 0.0
  %1473 = vmatpush1.msra.mxu0 0.0
  %1474 = vmatprep.subr.mxu0 0.0
  %1475 = vmatpush1.msra.mxu0 0.0
  %1476 = vmatprep.subr.mxu0 0.0
  %1477 = vmatpush1.msra.mxu0 0.0
  %1478 = vmatprep.subr.mxu0 0.0
  %1479 = vmatpush1.msra.mxu0 0.0
  %1480 = vmatprep.subr.mxu0 0.0
  %1481 = vmatpush1.msra.mxu0 0.0
  %1482 = vmatprep.subr.mxu0 0.0
  %1483 = vmatpush1.msra.mxu0 0.0
  %1484 = vmatprep.subr.mxu0 0.0
  %1485 = vmatpush1.msra.mxu0 0.0
  %1486 = vmatprep.subr.mxu0 0.0
  %1487 = vmatpush1.msra.mxu0 0.0
  %1488 = vmatprep.subr.mxu0 0.0
  %1489 = vmatpush1.msra.mxu0 0.0
  %1490 = vmatprep.subr.mxu0 0.0
  %1491 = vmatpush1.msra.mxu0 0.0
  %1492 = vmatprep.subr.mxu0 0.0
  %1493 = vmatpush1.msra.mxu0 0.0
  %1494 = vmatprep.subr.mxu0 0.0
  %1495 = vmatpush1.msra.mxu0 0.0
  %1496 = vmatprep.subr.mxu0 0.0
  %1497 = vmatpush1.msra.mxu0 0.0
  %1498 = vmatprep.subr.mxu0 0.0
  %1499 = vmatpush1.msra.mxu0 0.0
  %1500 = vmatprep.subr.mxu0 0.0
  %1501 = vmatpush1.msra.mxu0 0.0
  %1502 = vmatprep.subr.mxu0 0.0
  %1503 = vmatpush1.msra.mxu0 0.0
  %1504 = vmatprep.subr.mxu0 0.0
  %1505 = vmatpush1.msra.mxu0 0.0
  %1506 = vmatprep.subr.mxu0 0.0
  %1507 = vmatpush1.msra.mxu0 0.0
  %1508 = vmatprep.subr.mxu0 0.0
  %1509 = vmatpush1.msra.mxu0 0.0
  %1510 = vmatprep.subr.mxu0 0.0
  %1511 = vmatpush1.msra.mxu0 0.0
  %1512 = vmatprep.subr.mxu0 0.0
  %1513 = vmatpush1.msra.mxu0 0.0
  %1514 = vmatprep.subr.mxu0 0.0
  %1515 = vmatpush1.msra.mxu0 0.0
  %1516 = vmatprep.subr.mxu0 0.0
  %1517 = vmatpush1.msra.mxu0 0.0
  %1518 = vmatprep.subr.mxu0 0.0
  %1519 = vmatpush1.msra.mxu0 0.0
  %1520 = vmatprep.subr.mxu0 0.0
  %1521 = vmatpush1.msra.mxu0 0.0
  %1522 = vmatprep.subr.mxu0 0.0
  %1523 = vmatpush1.msra.mxu0 0.0
  %1524 = vmatprep.mubr.f32.mxu0 0.0
  %1525 = vmatmul.mubr.f32.gmra.mrb[0].mxu0 %v1458
  %v1526 = vpop.f32.mrb[0].mxu0
  %v1527 = vadd.f32 0.0, %v1526
  %v1528 = vpop.f32.mrb[0].mxu0
  %1529 = vdwg.mxu0
  %v1530 = vadd.f32 %v1153, %v1527
  %v1531 = vxor.u32 %v1530, 2147483648
  %v1532 = vmul.f32 %v1531, 1.442695
  %v1533 = vpow.pop %v1532
  %v1534 = vadd.f32 %v1533, 1.0
  %v1535 = vrcp.pop %v1534
  %v1536 = vmul.f32 1.0, %v1535
  %v1537 = vtanh.pop %v1530
  %v1538 = vmul.f32 %v1536, %v1448
  %1540 = vrot.lane.b32.xlu0 %v1537, 64
  %v1541 = vpop.permute.xlu0 %1540
  %v1543 = vmul.f32 %v1536, %v1541
  %1545 = vrot.lane.b32.xlu0 %v1543, 32
  %v1546 = vpop.permute.xlu0 %1545
  %v1548 = vadd.f32 %v1538, %v1546
  %v1549 = vtanh.pop %v1548
  %1551 = vrot.lane.b32.xlu0 %v1549, 64
  %v1552 = vpop.permute.xlu0 %1551
  %v1554 = vmul.f32 %v1536, %v1552
  %1556 = vrot.lane.b32.xlu0 %v1554, 32
  %v1557 = vpop.permute.xlu0 %1556
  %v1558 = vsel %vm188, %v1557, 0
  %1560 = vmatprep.subr.mxu0 0.0
  %1561 = vmatpush1.msra.mxu0 %v1156
  %1562 = vmatprep.subr.mxu0 0.0
  %1563 = vmatpush1.msra.mxu0 %v1157
  %1564 = vmatprep.subr.mxu0 0.0
  %1565 = vmatpush1.msra.mxu0 %v1158
  %1566 = vmatprep.subr.mxu0 0.0
  %1567 = vmatpush1.msra.mxu0 %v1159
  %1568 = vmatprep.subr.mxu0 0.0
  %1569 = vmatpush1.msra.mxu0 0.0
  %1570 = vmatprep.subr.mxu0 0.0
  %1571 = vmatpush1.msra.mxu0 0.0
  %1572 = vmatprep.subr.mxu0 0.0
  %1573 = vmatpush1.msra.mxu0 0.0
  %1574 = vmatprep.subr.mxu0 0.0
  %1575 = vmatpush1.msra.mxu0 0.0
  %1576 = vmatprep.subr.mxu0 0.0
  %1577 = vmatpush1.msra.mxu0 0.0
  %1578 = vmatprep.subr.mxu0 0.0
  %1579 = vmatpush1.msra.mxu0 0.0
  %1580 = vmatprep.subr.mxu0 0.0
  %1581 = vmatpush1.msra.mxu0 0.0
  %1582 = vmatprep.subr.mxu0 0.0
  %1583 = vmatpush1.msra.mxu0 0.0
  %1584 = vmatprep.subr.mxu0 0.0
  %1585 = vmatpush1.msra.mxu0 0.0
  %1586 = vmatprep.subr.mxu0 0.0
  %1587 = vmatpush1.msra.mxu0 0.0
  %1588 = vmatprep.subr.mxu0 0.0
  %1589 = vmatpush1.msra.mxu0 0.0
  %1590 = vmatprep.subr.mxu0 0.0
  %1591 = vmatpush1.msra.mxu0 0.0
  %1592 = vmatprep.subr.mxu0 0.0
  %1593 = vmatpush1.msra.mxu0 0.0
  %1594 = vmatprep.subr.mxu0 0.0
  %1595 = vmatpush1.msra.mxu0 0.0
  %1596 = vmatprep.subr.mxu0 0.0
  %1597 = vmatpush1.msra.mxu0 0.0
  %1598 = vmatprep.subr.mxu0 0.0
  %1599 = vmatpush1.msra.mxu0 0.0
  %1600 = vmatprep.subr.mxu0 0.0
  %1601 = vmatpush1.msra.mxu0 0.0
  %1602 = vmatprep.subr.mxu0 0.0
  %1603 = vmatpush1.msra.mxu0 0.0
  %1604 = vmatprep.subr.mxu0 0.0
  %1605 = vmatpush1.msra.mxu0 0.0
  %1606 = vmatprep.subr.mxu0 0.0
  %1607 = vmatpush1.msra.mxu0 0.0
  %1608 = vmatprep.subr.mxu0 0.0
  %1609 = vmatpush1.msra.mxu0 0.0
  %1610 = vmatprep.subr.mxu0 0.0
  %1611 = vmatpush1.msra.mxu0 0.0
  %1612 = vmatprep.subr.mxu0 0.0
  %1613 = vmatpush1.msra.mxu0 0.0
  %1614 = vmatprep.subr.mxu0 0.0
  %1615 = vmatpush1.msra.mxu0 0.0
  %1616 = vmatprep.subr.mxu0 0.0
  %1617 = vmatpush1.msra.mxu0 0.0
  %1618 = vmatprep.subr.mxu0 0.0
  %1619 = vmatpush1.msra.mxu0 0.0
  %1620 = vmatprep.subr.mxu0 0.0
  %1621 = vmatpush1.msra.mxu0 0.0
  %1622 = vmatprep.subr.mxu0 0.0
  %1623 = vmatpush1.msra.mxu0 0.0
  %1624 = vmatprep.mubr.f32.mxu0 0.0
  %1625 = vmatmul.mubr.f32.gmra.mrb[0].mxu0 %v1558
  %v1626 = vpop.f32.mrb[0].mxu0
  %v1627 = vadd.f32 0.0, %v1626
  %v1628 = vpop.f32.mrb[0].mxu0
  %1629 = vdwg.mxu0
  %v1630 = vadd.f32 %v1153, %v1627
  %v1631 = vxor.u32 %v1630, 2147483648
  %v1632 = vmul.f32 %v1631, 1.442695
  %v1633 = vpow.pop %v1632
  %v1634 = vadd.f32 %v1633, 1.0
  %v1635 = vrcp.pop %v1634
  %v1636 = vmul.f32 1.0, %v1635
  %v1637 = vtanh.pop %v1630
  %v1638 = vmul.f32 %v1636, %v1548
  %1640 = vrot.lane.b32.xlu0 %v1637, 64
  %v1641 = vpop.permute.xlu0 %1640
  %v1643 = vmul.f32 %v1636, %v1641
  %1645 = vrot.lane.b32.xlu0 %v1643, 32
  %v1646 = vpop.permute.xlu0 %1645
  %v1648 = vadd.f32 %v1638, %v1646
  %v1649 = vtanh.pop %v1648
  %1651 = vrot.lane.b32.xlu0 %v1649, 64
  %v1652 = vpop.permute.xlu0 %1651
  %v1654 = vmul.f32 %v1636, %v1652
  %1656 = vrot.lane.b32.xlu0 %v1654, 32
  %v1657 = vpop.permute.xlu0 %1656
  %v1658 = vsel %vm188, %v1657, 0
  %1660 = vmatprep.subr.mxu0 0.0
  %1661 = vmatpush1.msra.mxu0 %v1156
  %1662 = vmatprep.subr.mxu0 0.0
  %1663 = vmatpush1.msra.mxu0 %v1157
  %1664 = vmatprep.subr.mxu0 0.0
  %1665 = vmatpush1.msra.mxu0 %v1158
  %1666 = vmatprep.subr.mxu0 0.0
  %1667 = vmatpush1.msra.mxu0 %v1159
  %1668 = vmatprep.subr.mxu0 0.0
  %1669 = vmatpush1.msra.mxu0 0.0
  %1670 = vmatprep.subr.mxu0 0.0
  %1671 = vmatpush1.msra.mxu0 0.0
  %1672 = vmatprep.subr.mxu0 0.0
  %1673 = vmatpush1.msra.mxu0 0.0
  %1674 = vmatprep.subr.mxu0 0.0
  %1675 = vmatpush1.msra.mxu0 0.0
  %1676 = vmatprep.subr.mxu0 0.0
  %1677 = vmatpush1.msra.mxu0 0.0
  %1678 = vmatprep.subr.mxu0 0.0
  %1679 = vmatpush1.msra.mxu0 0.0
  %1680 = vmatprep.subr.mxu0 0.0
  %1681 = vmatpush1.msra.mxu0 0.0
  %1682 = vmatprep.subr.mxu0 0.0
  %1683 = vmatpush1.msra.mxu0 0.0
  %1684 = vmatprep.subr.mxu0 0.0
  %1685 = vmatpush1.msra.mxu0 0.0
  %1686 = vmatprep.subr.mxu0 0.0
  %1687 = vmatpush1.msra.mxu0 0.0
  %1688 = vmatprep.subr.mxu0 0.0
  %1689 = vmatpush1.msra.mxu0 0.0
  %1690 = vmatprep.subr.mxu0 0.0
  %1691 = vmatpush1.msra.mxu0 0.0
  %1692 = vmatprep.subr.mxu0 0.0
  %1693 = vmatpush1.msra.mxu0 0.0
  %1694 = vmatprep.subr.mxu0 0.0
  %1695 = vmatpush1.msra.mxu0 0.0
  %1696 = vmatprep.subr.mxu0 0.0
  %1697 = vmatpush1.msra.mxu0 0.0
  %1698 = vmatprep.subr.mxu0 0.0
  %1699 = vmatpush1.msra.mxu0 0.0
  %1700 = vmatprep.subr.mxu0 0.0
  %1701 = vmatpush1.msra.mxu0 0.0
  %1702 = vmatprep.subr.mxu0 0.0
  %1703 = vmatpush1.msra.mxu0 0.0
  %1704 = vmatprep.subr.mxu0 0.0
  %1705 = vmatpush1.msra.mxu0 0.0
  %1706 = vmatprep.subr.mxu0 0.0
  %1707 = vmatpush1.msra.mxu0 0.0
  %1708 = vmatprep.subr.mxu0 0.0
  %1709 = vmatpush1.msra.mxu0 0.0
  %1710 = vmatprep.subr.mxu0 0.0
  %1711 = vmatpush1.msra.mxu0 0.0
  %1712 = vmatprep.subr.mxu0 0.0
  %1713 = vmatpush1.msra.mxu0 0.0
  %1714 = vmatprep.subr.mxu0 0.0
  %1715 = vmatpush1.msra.mxu0 0.0
  %1716 = vmatprep.subr.mxu0 0.0
  %1717 = vmatpush1.msra.mxu0 0.0
  %1718 = vmatprep.subr.mxu0 0.0
  %1719 = vmatpush1.msra.mxu0 0.0
  %1720 = vmatprep.subr.mxu0 0.0
  %1721 = vmatpush1.msra.mxu0 0.0
  %1722 = vmatprep.subr.mxu0 0.0
  %1723 = vmatpush1.msra.mxu0 0.0
  %1724 = vmatprep.mubr.f32.mxu0 0.0
  %1725 = vmatmul.mubr.f32.gmra.mrb[0].mxu0 %v1658
  %v1726 = vpop.f32.mrb[0].mxu0
  %v1727 = vadd.f32 0.0, %v1726
  %v1728 = vpop.f32.mrb[0].mxu0
  %1729 = vdwg.mxu0
  %v1730 = vadd.f32 %v1153, %v1727
  %v1731 = vxor.u32 %v1730, 2147483648
  %v1732 = vmul.f32 %v1731, 1.442695
  %v1733 = vpow.pop %v1732
  %v1734 = vadd.f32 %v1733, 1.0
  %v1735 = vrcp.pop %v1734
  %v1736 = vmul.f32 1.0, %v1735
  %v1737 = vtanh.pop %v1730
  %v1738 = vmul.f32 %v1736, %v1648
  %1740 = vrot.lane.b32.xlu0 %v1737, 64
  %v1741 = vpop.permute.xlu0 %1740
  %v1743 = vmul.f32 %v1736, %v1741
  %1745 = vrot.lane.b32.xlu0 %v1743, 32
  %v1746 = vpop.permute.xlu0 %1745
  %v1748 = vadd.f32 %v1738, %v1746
  %v1749 = vtanh.pop %v1748
  %1751 = vrot.lane.b32.xlu0 %v1749, 64
  %v1752 = vpop.permute.xlu0 %1751
  %v1754 = vmul.f32 %v1736, %v1752
  %1756 = vrot.lane.b32.xlu0 %v1754, 32
  %v1757 = vpop.permute.xlu0 %1756
  %v1758 = vsel %vm188, %v1757, 0
  %1760 = vmatprep.subr.mxu0 0.0
  %1761 = vmatpush1.msra.mxu0 %v1156
  %1762 = vmatprep.subr.mxu0 0.0
  %1763 = vmatpush1.msra.mxu0 %v1157
  %1764 = vmatprep.subr.mxu0 0.0
  %1765 = vmatpush1.msra.mxu0 %v1158
  %1766 = vmatprep.subr.mxu0 0.0
  %1767 = vmatpush1.msra.mxu0 %v1159
  %1768 = vmatprep.subr.mxu0 0.0
  %1769 = vmatpush1.msra.mxu0 0.0
  %1770 = vmatprep.subr.mxu0 0.0
  %1771 = vmatpush1.msra.mxu0 0.0
  %1772 = vmatprep.subr.mxu0 0.0
  %1773 = vmatpush1.msra.mxu0 0.0
  %1774 = vmatprep.subr.mxu0 0.0
  %1775 = vmatpush1.msra.mxu0 0.0
  %1776 = vmatprep.subr.mxu0 0.0
  %1777 = vmatpush1.msra.mxu0 0.0
  %1778 = vmatprep.subr.mxu0 0.0
  %1779 = vmatpush1.msra.mxu0 0.0
  %1780 = vmatprep.subr.mxu0 0.0
  %1781 = vmatpush1.msra.mxu0 0.0
  %1782 = vmatprep.subr.mxu0 0.0
  %1783 = vmatpush1.msra.mxu0 0.0
  %1784 = vmatprep.subr.mxu0 0.0
  %1785 = vmatpush1.msra.mxu0 0.0
  %1786 = vmatprep.subr.mxu0 0.0
  %1787 = vmatpush1.msra.mxu0 0.0
  %1788 = vmatprep.subr.mxu0 0.0
  %1789 = vmatpush1.msra.mxu0 0.0
  %1790 = vmatprep.subr.mxu0 0.0
  %1791 = vmatpush1.msra.mxu0 0.0
  %1792 = vmatprep.subr.mxu0 0.0
  %1793 = vmatpush1.msra.mxu0 0.0
  %1794 = vmatprep.subr.mxu0 0.0
  %1795 = vmatpush1.msra.mxu0 0.0
  %1796 = vmatprep.subr.mxu0 0.0
  %1797 = vmatpush1.msra.mxu0 0.0
  %1798 = vmatprep.subr.mxu0 0.0
  %1799 = vmatpush1.msra.mxu0 0.0
  %1800 = vmatprep.subr.mxu0 0.0
  %1801 = vmatpush1.msra.mxu0 0.0
  %1802 = vmatprep.subr.mxu0 0.0
  %1803 = vmatpush1.msra.mxu0 0.0
  %1804 = vmatprep.subr.mxu0 0.0
  %1805 = vmatpush1.msra.mxu0 0.0
  %1806 = vmatprep.subr.mxu0 0.0
  %1807 = vmatpush1.msra.mxu0 0.0
  %1808 = vmatprep.subr.mxu0 0.0
  %1809 = vmatpush1.msra.mxu0 0.0
  %1810 = vmatprep.subr.mxu0 0.0
  %1811 = vmatpush1.msra.mxu0 0.0
  %1812 = vmatprep.subr.mxu0 0.0
  %1813 = vmatpush1.msra.mxu0 0.0
  %1814 = vmatprep.subr.mxu0 0.0
  %1815 = vmatpush1.msra.mxu0 0.0
  %1816 = vmatprep.subr.mxu0 0.0
  %1817 = vmatpush1.msra.mxu0 0.0
  %1818 = vmatprep.subr.mxu0 0.0
  %1819 = vmatpush1.msra.mxu0 0.0
  %1820 = vmatprep.subr.mxu0 0.0
  %1821 = vmatpush1.msra.mxu0 0.0
  %1822 = vmatprep.subr.mxu0 0.0
  %1823 = vmatpush1.msra.mxu0 0.0
  %1824 = vmatprep.mubr.f32.mxu0 0.0
  %1825 = vmatmul.mubr.f32.gmra.mrb[0].mxu0 %v1758
  %v1826 = vpop.f32.mrb[0].mxu0
  %v1827 = vadd.f32 0.0, %v1826
  %v1828 = vpop.f32.mrb[0].mxu0
  %1829 = vdwg.mxu0
  %v1830 = vadd.f32 %v1153, %v1827
  %v1831 = vxor.u32 %v1830, 2147483648
  %v1832 = vmul.f32 %v1831, 1.442695
  %v1833 = vpow.pop %v1832
  %v1834 = vadd.f32 %v1833, 1.0
  %v1835 = vrcp.pop %v1834
  %v1836 = vmul.f32 1.0, %v1835
  %v1837 = vtanh.pop %v1830
  %v1838 = vmul.f32 %v1836, %v1748
  %1840 = vrot.lane.b32.xlu0 %v1837, 64
  %v1841 = vpop.permute.xlu0 %1840
  %v1843 = vmul.f32 %v1836, %v1841
  %1845 = vrot.lane.b32.xlu0 %v1843, 32
  %v1846 = vpop.permute.xlu0 %1845
  %v1848 = vadd.f32 %v1838, %v1846
  %v1849 = vtanh.pop %v1848
  %1851 = vrot.lane.b32.xlu0 %v1849, 64
  %v1852 = vpop.permute.xlu0 %1851
  %v1854 = vmul.f32 %v1836, %v1852
  %1856 = vrot.lane.b32.xlu0 %v1854, 32
  %v1857 = vpop.permute.xlu0 %1856
  %v1858 = vsel %vm188, %v1857, 0
  %1860 = vmatprep.subr.mxu0 0.0
  %1861 = vmatpush1.msra.mxu0 %v1156
  %1862 = vmatprep.subr.mxu0 0.0
  %1863 = vmatpush1.msra.mxu0 %v1157
  %1864 = vmatprep.subr.mxu0 0.0
  %1865 = vmatpush1.msra.mxu0 %v1158
  %1866 = vmatprep.subr.mxu0 0.0
  %1867 = vmatpush1.msra.mxu0 %v1159
  %1868 = vmatprep.subr.mxu0 0.0
  %1869 = vmatpush1.msra.mxu0 0.0
  %1870 = vmatprep.subr.mxu0 0.0
  %1871 = vmatpush1.msra.mxu0 0.0
  %1872 = vmatprep.subr.mxu0 0.0
  %1873 = vmatpush1.msra.mxu0 0.0
  %1874 = vmatprep.subr.mxu0 0.0
  %1875 = vmatpush1.msra.mxu0 0.0
  %1876 = vmatprep.subr.mxu0 0.0
  %1877 = vmatpush1.msra.mxu0 0.0
  %1878 = vmatprep.subr.mxu0 0.0
  %1879 = vmatpush1.msra.mxu0 0.0
  %1880 = vmatprep.subr.mxu0 0.0
  %1881 = vmatpush1.msra.mxu0 0.0
  %1882 = vmatprep.subr.mxu0 0.0
  %1883 = vmatpush1.msra.mxu0 0.0
  %1884 = vmatprep.subr.mxu0 0.0
  %1885 = vmatpush1.msra.mxu0 0.0
  %1886 = vmatprep.subr.mxu0 0.0
  %1887 = vmatpush1.msra.mxu0 0.0
  %1888 = vmatprep.subr.mxu0 0.0
  %1889 = vmatpush1.msra.mxu0 0.0
  %1890 = vmatprep.subr.mxu0 0.0
  %1891 = vmatpush1.msra.mxu0 0.0
  %1892 = vmatprep.subr.mxu0 0.0
  %1893 = vmatpush1.msra.mxu0 0.0
  %1894 = vmatprep.subr.mxu0 0.0
  %1895 = vmatpush1.msra.mxu0 0.0
  %1896 = vmatprep.subr.mxu0 0.0
  %1897 = vmatpush1.msra.mxu0 0.0
  %1898 = vmatprep.subr.mxu0 0.0
  %1899 = vmatpush1.msra.mxu0 0.0
  %1900 = vmatprep.subr.mxu0 0.0
  %1901 = vmatpush1.msra.mxu0 0.0
  %1902 = vmatprep.subr.mxu0 0.0
  %1903 = vmatpush1.msra.mxu0 0.0
  %1904 = vmatprep.subr.mxu0 0.0
  %1905 = vmatpush1.msra.mxu0 0.0
  %1906 = vmatprep.subr.mxu0 0.0
  %1907 = vmatpush1.msra.mxu0 0.0
  %1908 = vmatprep.subr.mxu0 0.0
  %1909 = vmatpush1.msra.mxu0 0.0
  %1910 = vmatprep.subr.mxu0 0.0
  %1911 = vmatpush1.msra.mxu0 0.0
  %1912 = vmatprep.subr.mxu0 0.0
  %1913 = vmatpush1.msra.mxu0 0.0
  %1914 = vmatprep.subr.mxu0 0.0
  %1915 = vmatpush1.msra.mxu0 0.0
  %1916 = vmatprep.subr.mxu0 0.0
  %1917 = vmatpush1.msra.mxu0 0.0
  %1918 = vmatprep.subr.mxu0 0.0
  %1919 = vmatpush1.msra.mxu0 0.0
  %1920 = vmatprep.subr.mxu0 0.0
  %1921 = vmatpush1.msra.mxu0 0.0
  %1922 = vmatprep.subr.mxu0 0.0
  %1923 = vmatpush1.msra.mxu0 0.0
  %1924 = vmatprep.mubr.f32.mxu0 0.0
  %1925 = vmatmul.mubr.f32.gmra.mrb[0].mxu0 %v1858
  %v1926 = vpop.f32.mrb[0].mxu0
  %v1927 = vadd.f32 0.0, %v1926
  %v1928 = vpop.f32.mrb[0].mxu0
  %1929 = vdwg.mxu0
  %v1930 = vadd.f32 %v1153, %v1927
  %v1931 = vxor.u32 %v1930, 2147483648
  %v1932 = vmul.f32 %v1931, 1.442695
  %v1933 = vpow.pop %v1932
  %v1934 = vadd.f32 %v1933, 1.0
  %v1935 = vrcp.pop %v1934
  %v1936 = vmul.f32 1.0, %v1935
  %v1937 = vtanh.pop %v1930
  %v1938 = vmul.f32 %v1936, %v1848
  %1940 = vrot.lane.b32.xlu0 %v1937, 64
  %v1941 = vpop.permute.xlu0 %1940
  %v1943 = vmul.f32 %v1936, %v1941
  %1945 = vrot.lane.b32.xlu0 %v1943, 32
  %v1946 = vpop.permute.xlu0 %1945
  %v1948 = vadd.f32 %v1938, %v1946
  %v1949 = vtanh.pop %v1948
  %1951 = vrot.lane.b32.xlu0 %v1949, 64
  %v1952 = vpop.permute.xlu0 %1951
  %v1954 = vmul.f32 %v1936, %v1952
  %v1955 = vld [vmem:[%s9] sm:$0xff]
  %v1956 = vld [vmem:[%s9 + $0x8] sm:$0xff]
  %v1957 = vld [vmem:[%s9 + $0x10] sm:$0xff]
  %v1958 = vld [vmem:[%s9 + $0x18] sm:$0xff]
  %v1959 = vld [vmem:[%s10] sm:$0x1]
  %v1961 = vlaneseq
  %v1962 = vshrl.u32 %v1961, 7
  %v1963 = vsub.s32 0, %v1962
  %v1964 = vrot.slane %v1959, %v1963
  %1967 = vrot.lane.b32.xlu0 %v1954, 32
  %v1968 = vpop.permute.xlu0 %1967
  %v1969 = vsel %vm188, %v1968, 0
  %1971 = vmatprep.subr.mxu0 0.0
  %1972 = vmatpush1.msra.mxu0 %v1955
  %1973 = vmatprep.subr.mxu0 0.0
  %1974 = vmatpush1.msra.mxu0 %v1956
  %1975 = vmatprep.subr.mxu0 0.0
  %1976 = vmatpush1.msra.mxu0 %v1957
  %1977 = vmatprep.subr.mxu0 0.0
  %1978 = vmatpush1.msra.mxu0 %v1958
  %1979 = vmatprep.subr.mxu0 0.0
  %1980 = vmatpush1.msra.mxu0 0.0
  %1981 = vmatprep.subr.mxu0 0.0
  %1982 = vmatpush1.msra.mxu0 0.0
  %1983 = vmatprep.subr.mxu0 0.0
  %1984 = vmatpush1.msra.mxu0 0.0
  %1985 = vmatprep.subr.mxu0 0.0
  %1986 = vmatpush1.msra.mxu0 0.0
  %1987 = vmatprep.subr.mxu0 0.0
  %1988 = vmatpush1.msra.mxu0 0.0
  %1989 = vmatprep.subr.mxu0 0.0
  %1990 = vmatpush1.msra.mxu0 0.0
  %1991 = vmatprep.subr.mxu0 0.0
  %1992 = vmatpush1.msra.mxu0 0.0
  %1993 = vmatprep.subr.mxu0 0.0
  %1994 = vmatpush1.msra.mxu0 0.0
  %1995 = vmatprep.subr.mxu0 0.0
  %1996 = vmatpush1.msra.mxu0 0.0
  %1997 = vmatprep.subr.mxu0 0.0
  %1998 = vmatpush1.msra.mxu0 0.0
  %1999 = vmatprep.subr.mxu0 0.0
  %2000 = vmatpush1.msra.mxu0 0.0
  %2001 = vmatprep.subr.mxu0 0.0
  %2002 = vmatpush1.msra.mxu0 0.0
  %2003 = vmatprep.subr.mxu0 0.0
  %2004 = vmatpush1.msra.mxu0 0.0
  %2005 = vmatprep.subr.mxu0 0.0
  %2006 = vmatpush1.msra.mxu0 0.0
  %2007 = vmatprep.subr.mxu0 0.0
  %2008 = vmatpush1.msra.mxu0 0.0
  %2009 = vmatprep.subr.mxu0 0.0
  %2010 = vmatpush1.msra.mxu0 0.0
  %2011 = vmatprep.subr.mxu0 0.0
  %2012 = vmatpush1.msra.mxu0 0.0
  %2013 = vmatprep.subr.mxu0 0.0
  %2014 = vmatpush1.msra.mxu0 0.0
  %2015 = vmatprep.subr.mxu0 0.0
  %2016 = vmatpush1.msra.mxu0 0.0
  %2017 = vmatprep.subr.mxu0 0.0
  %2018 = vmatpush1.msra.mxu0 0.0
  %2019 = vmatprep.subr.mxu0 0.0
  %2020 = vmatpush1.msra.mxu0 0.0
  %2021 = vmatprep.subr.mxu0 0.0
  %2022 = vmatpush1.msra.mxu0 0.0
  %2023 = vmatprep.subr.mxu0 0.0
  %2024 = vmatpush1.msra.mxu0 0.0
  %2025 = vmatprep.subr.mxu0 0.0
  %2026 = vmatpush1.msra.mxu0 0.0
  %2027 = vmatprep.subr.mxu0 0.0
  %2028 = vmatpush1.msra.mxu0 0.0
  %2029 = vmatprep.subr.mxu0 0.0
  %2030 = vmatpush1.msra.mxu0 0.0
  %2031 = vmatprep.subr.mxu0 0.0
  %2032 = vmatpush1.msra.mxu0 0.0
  %2033 = vmatprep.subr.mxu0 0.0
  %2034 = vmatpush1.msra.mxu0 0.0
  %2035 = vmatprep.mubr.f32.mxu0 0.0
  %2036 = vmatmul.mubr.f32.gmra.mrb[0].mxu0 %v1258
  %v2037 = vpop.f32.mrb[0].mxu0
  %v2038 = vadd.f32 %v1964, %v2037
  %v2039 = vpop.f32.mrb[0].mxu0
  %2040 = vmatprep.mubr.f32.mxu0 0.0
  %2041 = vmatmul.mubr.f32.gmra.mrb[0].mxu0 %v1358
  %v2042 = vpop.f32.mrb[0].mxu0
  %v2043 = vadd.f32 %v1964, %v2042
  %v2044 = vpop.f32.mrb[0].mxu0
  %2045 = vmatprep.mubr.f32.mxu0 0.0
  %2046 = vmatmul.mubr.f32.gmra.mrb[0].mxu0 %v1458
  %v2047 = vpop.f32.mrb[0].mxu0
  %v2048 = vadd.f32 %v1964, %v2047
  %v2049 = vpop.f32.mrb[0].mxu0
  %2050 = vmatprep.mubr.f32.mxu0 0.0
  %2051 = vmatmul.mubr.f32.gmra.mrb[0].mxu0 %v1558
  %v2052 = vpop.f32.mrb[0].mxu0
  %v2053 = vadd.f32 %v1964, %v2052
  %v2054 = vpop.f32.mrb[0].mxu0
  %2055 = vmatprep.mubr.f32.mxu0 0.0
  %2056 = vmatmul.mubr.f32.gmra.mrb[0].mxu0 %v1658
  %v2057 = vpop.f32.mrb[0].mxu0
  %v2058 = vadd.f32 %v1964, %v2057
  %v2059 = vpop.f32.mrb[0].mxu0
  %2060 = vmatprep.mubr.f32.mxu0 0.0
  %2061 = vmatmul.mubr.f32.gmra.mrb[0].mxu0 %v1758
  %v2062 = vpop.f32.mrb[0].mxu0
  %v2063 = vadd.f32 %v1964, %v2062
  %v2064 = vpop.f32.mrb[0].mxu0
  %2065 = vmatprep.mubr.f32.mxu0 0.0
  %2066 = vmatmul.mubr.f32.gmra.mrb[0].mxu0 %v1858
  %v2067 = vpop.f32.mrb[0].mxu0
  %v2068 = vadd.f32 %v1964, %v2067
  %v2069 = vpop.f32.mrb[0].mxu0
  %2070 = vmatprep.mubr.f32.mxu0 0.0
  %2071 = vmatmul.mubr.f32.gmra.mrb[0].mxu0 %v1969
  %v2072 = vpop.f32.mrb[0].mxu0
  %v2073 = vadd.f32 %v1964, %v2072
  %v2074 = vpop.f32.mrb[0].mxu0
  %2075 = vdwg.mxu0
  %2076 = vst.msk [vmem:[%s11] sm:$0xff] %vm54, %v2038
  %2077 = vst.msk [vmem:[%s11 + $0x8] sm:$0xff] %vm54, %v2043
  %2078 = vst.msk [vmem:[%s11 + $0x10] sm:$0xff] %vm54, %v2048
  %2079 = vst.msk [vmem:[%s11 + $0x18] sm:$0xff] %vm54, %v2053
  %2080 = vst.msk [vmem:[%s11 + $0x20] sm:$0xff] %vm54, %v2058
  %2081 = vst.msk [vmem:[%s11 + $0x28] sm:$0xff] %vm54, %v2063
  %2082 = vst.msk [vmem:[%s11 + $0x30] sm:$0xff] %vm54, %v2068
  %2083 = vst.msk [vmem:[%s11 + $0x38] sm:$0xff] %vm54, %v2073
  // Predicated region
  $region46: #{tpu_custom_call.1} parent=0 // pred_check
    _
  $region47: #{tpu_custom_call.1} parent=0 // pred_check_branch
    %2085 = sbr.rel (0) target = $region49
  $region48: #{tpu_custom_call.1} parent=0 // pred_region
    _
  $region49: #{tpu_custom_call.1} parent=0 // pred_fallthru
    _
  // Predicated region
  $region50: #{tpu_custom_call.1} parent=0 // pred_check
    _
  $region51: #{tpu_custom_call.1} parent=0 // pred_check_branch
    %2087 = sbr.rel (0) target = $region53
  $region52: #{tpu_custom_call.1} parent=0 // pred_region
    _
  $region53: #{tpu_custom_call.1} parent=0 // pred_fallthru
    _

</llo_original>
